<compile_context>
chip_gen: v7x
topology: tpu7x:2x2x1
jax: 0.10.0
libtpu: 0.0.40
codegen_flags: <defaults>
</compile_context>

<pallas_src>
import jax
import jax.numpy as jnp
import numpy as np
from jax.experimental import pallas as pl
from jax.experimental.pallas import tpu as pltpu


def layer_kernel(prev_ref, x_ref, nxt_ref, scale_ref, shift_ref, w_ref, o_ref):
    """One (batch image, row strip) grid step.

    prev_ref:  (1, 1,  W, Cin)  row above the strip (clamped at the top edge)
    x_ref:     (1, TH, W, Cin)  the strip itself
    nxt_ref:   (1, 1,  W, Cin)  row below the strip (clamped at the bottom edge)
    scale_ref: (1, Cin)         folded BN scale = gamma / sqrt(var + eps)
    shift_ref: (1, Cin)         folded BN shift = beta - mean * scale
    w_ref:     (3, 3, Cin, CP)  conv weights (HWIO), Cout zero-padded to CP, bf16
    o_ref:     (1, TH, W, CP)   lane-dense output block
    """
    _, TH, W, Cin = x_ref.shape
    CP = o_ref.shape[-1]
    s = pl.program_id(1)
    n_strips = pl.num_programs(1)

    scale = scale_ref[...].reshape(1, 1, 1, Cin)
    shift = shift_ref[...].reshape(1, 1, 1, Cin)

    def bn_relu(v):
        # f32 VPU math on all generations (v5e has no bf16 VALU).
        return jnp.maximum(v * scale + shift, 0.0)

    main = bn_relu(x_ref[...])
    prev = bn_relu(prev_ref[...])
    nxt = bn_relu(nxt_ref[...])

    # Halo rows that fall outside the image must be exact zeros: the clamped
    # edge fetch holds a duplicated in-range row, and BN+ReLU(0) != 0 anyway.
    prev = prev * (s > 0).astype(prev.dtype)
    nxt = nxt * (s < n_strips - 1).astype(nxt.dtype)

    a = jnp.concatenate([prev, main, nxt], axis=1)[0]      # (TH+2, W, Cin) f32

    # Hoist the kx (sublane) shift: build the 3 column-shifted views once and
    # reuse each across the 3 ky taps.  Zero columns realize the W=+/-1 halo.
    zcol = jnp.zeros((TH + 2, 1, Cin), a.dtype)
    cols = (
        jnp.concatenate([zcol, a[:, : W - 1, :]], axis=1),  # kx = 0 -> col x-1
        a,                                                  # kx = 1 -> col x
        jnp.concatenate([a[:, 1:, :], zcol], axis=1),       # kx = 2 -> col x+1
    )

    w = w_ref[...]                                          # (3, 3, Cin, CP) bf16
    acc = jnp.zeros((TH * W, CP), jnp.float32)
    for kx in range(3):
        col = cols[kx].astype(jnp.bfloat16)                 # cast only at MXU boundary
        for ky in range(3):
            tap = col[ky:ky + TH].reshape(TH * W, Cin)
            acc = acc + jnp.dot(tap, w[ky, kx],
                                preferred_element_type=jnp.float32)

    o_ref[...] = acc.reshape(1, TH, W, CP).astype(o_ref.dtype)


def _pick_row_tile(H, W, Cin, cout_pad, budget_bytes=8 << 20):
    """Largest row tile whose per-step working set (double-buffered input strip
    + halo rows, activation views, f32 accumulator, double-buffered output
    block) stays well inside v7x's 32 MiB scoped-VMEM default (and far inside
    v5e/v6e).  At real FC-DenseNet shapes this also keeps M = TH*W large enough
    to amortize MXU fill/drain on v5e."""
    best = 1
    for th in range(1, H + 1):
        if H % th:
            continue
        in_bytes = 2 * (th + 2) * W * Cin * 4
        act_bytes = 3 * (th + 2) * W * Cin * 4 + th * W * cout_pad * 4
        out_bytes = 2 * th * W * cout_pad * 4
        if in_bytes + act_bytes + out_bytes <= budget_bytes:
            best = th
    return best


def layer_forward(x_nhwc, gamma, beta, running_mean, running_var, weight_hwio,
                  eps=1e-5, row_tile=None):
    """x_nhwc: (N, H, W, Cin) float32; weight_hwio: (3, 3, Cin, Cout). Eval mode."""
    N, H, W, Cin = x_nhwc.shape
    Cout = weight_hwio.shape[-1]
    cout_pad = max(128, ((Cout + 127) // 128) * 128)        # lane-dense output width

    if row_tile is None:
        row_tile = _pick_row_tile(H, W, Cin, cout_pad)
    if H % row_tile != 0:
        raise ValueError(f"row_tile={row_tile} must divide H={H}")
    TH = row_tile
    n_strips = H // TH

    # Fold eval-mode BatchNorm into per-channel scale/shift.
    inv_std = 1.0 / jnp.sqrt(running_var.astype(jnp.float32) + eps)
    scale = gamma.astype(jnp.float32) * inv_std
    shift = beta.astype(jnp.float32) - running_mean.astype(jnp.float32) * scale
    scale = scale.reshape(1, Cin)
    shift = shift.reshape(1, Cin)

    # Conv weights: HWIO, bf16 (MXU-native), Cout zero-padded to lane-dense 128.
    w = jnp.pad(weight_hwio.astype(jnp.bfloat16),
                ((0, 0), (0, 0), (0, 0), (0, cout_pad - Cout)))

    def strip_map(n, s):
        return (n, s, 0, 0)

    def prev_row_map(n, s):                                  # row above the strip
        return (n, jnp.maximum(s * TH - 1, 0), 0, 0)         # clamp at top edge

    def next_row_map(n, s):                                  # row below the strip
        return (n, jnp.minimum((s + 1) * TH, H - 1), 0, 0)   # clamp at bottom edge

    def resident4(n, s):                                     # fetched once, stays in VMEM
        return (0, 0, 0, 0)

    def resident2(n, s):
        return (0, 0)

    out = pl.pallas_call(
        layer_kernel,
        out_shape=jax.ShapeDtypeStruct((N, H, W, cout_pad), jnp.float32),
        grid_spec=pltpu.PrefetchScalarGridSpec(
            num_scalar_prefetch=0,
            grid=(N, n_strips),
            in_specs=[
                pl.BlockSpec((1, 1, W, Cin), prev_row_map),
                pl.BlockSpec((1, TH, W, Cin), strip_map),
                pl.BlockSpec((1, 1, W, Cin), next_row_map),
                pl.BlockSpec((1, Cin), resident2),
                pl.BlockSpec((1, Cin), resident2),
                pl.BlockSpec((3, 3, Cin, cout_pad), resident4),
            ],
            out_specs=pl.BlockSpec((1, TH, W, cout_pad), strip_map),
        ),
        compiler_params=pltpu.CompilerParams(
            dimension_semantics=("parallel", "parallel")),
    )(x_nhwc, x_nhwc, x_nhwc, scale, shift, w)

    # TODO(synk): at production shapes, hand the padded (N, H, W, 128) slab to
    # the DenseNet concat directly instead of paying this narrowing HBM pass.
    return out[..., :Cout]


if __name__ == "__main__":
    # Small shapes consistent with Layer(in_channels=4, growth_rate=12).
    N, Cin, H, W = 2, 4, 16, 16
    growth_rate = 12
    eps = 1e-5

    key = jax.random.PRNGKey(0)
    k1, k2, k3, k4, k5, k6 = jax.random.split(key, 6)

    # PyTorch-style NCHW input.
    x_nchw = jax.random.normal(k1, (N, Cin, H, W), dtype=jnp.float32)

    # BatchNorm2d parameters / running stats (deterministic synthetic init).
    gamma = 1.0 + 0.1 * jax.random.normal(k2, (Cin,), dtype=jnp.float32)
    beta = 0.1 * jax.random.normal(k3, (Cin,), dtype=jnp.float32)
    running_mean = 0.1 * jax.random.normal(k4, (Cin,), dtype=jnp.float32)
    running_var = jax.random.uniform(k5, (Cin,), dtype=jnp.float32,
                                     minval=0.5, maxval=1.5)

    # Conv2d weight: PyTorch layout (Cout, Cin, 3, 3) -> HWIO (3, 3, Cin, Cout).
    w_oihw = 0.1 * jax.random.normal(k6, (growth_rate, Cin, 3, 3),
                                     dtype=jnp.float32)
    w_hwio = jnp.transpose(w_oihw, (2, 3, 1, 0))

    # NCHW -> NHWC for the kernel.
    x_nhwc = jnp.transpose(x_nchw, (0, 2, 3, 1))

    # Force 2 row strips so the cross-strip halo path is exercised at this toy H.
    out = layer_forward(x_nhwc, gamma, beta, running_mean, running_var, w_hwio,
                        eps=eps, row_tile=8)
    out = jax.block_until_ready(out)
    # Also run with the VMEM-budget heuristic tile (whole image at this size).
    out_auto = layer_forward(x_nhwc, gamma, beta, running_mean, running_var,
                             w_hwio, eps=eps)
    out_auto = jax.block_until_ready(out_auto)

    # Pure-JAX reference: identical folded BN + ReLU, conv with operands rounded
    # to bf16 exactly like the kernel's MXU inputs (dropout is identity in eval).
    inv_std = 1.0 / jnp.sqrt(running_var + eps)
    scale_ref = gamma * inv_std
    shift_ref = beta - running_mean * scale_ref
    a_ref = jnp.maximum(x_nhwc * scale_ref + shift_ref, 0.0)
    a_bf = a_ref.astype(jnp.bfloat16).astype(jnp.float32)
    w_bf = w_hwio.astype(jnp.bfloat16).astype(jnp.float32)
    ref = jax.lax.conv_general_dilated(
        a_bf, w_bf, window_strides=(1, 1), padding=((1, 1), (1, 1)),
        dimension_numbers=("NHWC", "HWIO", "NHWC"))

    np.testing.assert_allclose(np.asarray(out), np.asarray(ref),
                               rtol=5e-3, atol=5e-3)
    np.testing.assert_allclose(np.asarray(out_auto), np.asarray(ref),
                               rtol=5e-3, atol=5e-3)
    assert out.shape == (N, H, W, growth_rate)
    print("KERNEL_OK")
</pallas_src>

<mosaic_0001>
module attributes {stable_mosaic.version = 11 : i64} {
  func.func @layer_kernel(%arg0: i32, %arg1: i32, %arg2: memref<1x1x16x4xf32, #tpu.memory_space<vmem>>, %arg3: memref<1x8x16x4xf32, #tpu.memory_space<vmem>>, %arg4: memref<1x1x16x4xf32, #tpu.memory_space<vmem>>, %arg5: memref<1x4xf32, #tpu.memory_space<vmem>>, %arg6: memref<1x4xf32, #tpu.memory_space<vmem>>, %arg7: memref<3x3x4x128xbf16, #tpu.memory_space<vmem>>, %arg8: memref<1x8x16x128xf32, #tpu.memory_space<vmem>>) attributes {dimension_semantics = [#tpu.dimension_semantics<parallel>, #tpu.dimension_semantics<parallel>], iteration_bounds = array<i64: 2, 2>, scalar_prefetch = 0 : i64, scratch_operands = 0 : i64, tpu.core_type = #tpu.core_type<tc>, window_params = [{transform_indices = @transform_0, window_bounds = array<i64: 1, 1, 16, 4>}, {transform_indices = @transform_1, window_bounds = array<i64: 1, 8, 16, 4>}, {transform_indices = @transform_2, window_bounds = array<i64: 1, 1, 16, 4>}, {pipeline_mode = #tpu.pipeline_mode<synchronous>, transform_indices = @transform_3, window_bounds = array<i64: 1, 4>}, {pipeline_mode = #tpu.pipeline_mode<synchronous>, transform_indices = @transform_4, window_bounds = array<i64: 1, 4>}, {pipeline_mode = #tpu.pipeline_mode<synchronous>, transform_indices = @transform_5, window_bounds = array<i64: 3, 3, 4, 128>}, {transform_indices = @transform_6, window_bounds = array<i64: 1, 8, 16, 128>}]} {
    %c0 = arith.constant 0 : index
    %c0_0 = arith.constant 0 : index
    %0 = vector.load %arg5[%c0, %c0_0] : memref<1x4xf32, #tpu.memory_space<vmem>>, vector<1x4xf32>
    %1 = vector.shape_cast %0 : vector<1x4xf32> to vector<1x1x1x4xf32>
    %c0_1 = arith.constant 0 : index
    %c0_2 = arith.constant 0 : index
    %2 = vector.load %arg6[%c0_1, %c0_2] : memref<1x4xf32, #tpu.memory_space<vmem>>, vector<1x4xf32>
    %3 = vector.shape_cast %2 : vector<1x4xf32> to vector<1x1x1x4xf32>
    %c0_3 = arith.constant 0 : index
    %c0_4 = arith.constant 0 : index
    %c0_5 = arith.constant 0 : index
    %c0_6 = arith.constant 0 : index
    %4 = vector.load %arg3[%c0_3, %c0_4, %c0_5, %c0_6] : memref<1x8x16x4xf32, #tpu.memory_space<vmem>>, vector<1x8x16x4xf32>
    %5 = vector.broadcast %1 : vector<1x1x1x4xf32> to vector<1x8x16x4xf32>
    %6 = arith.mulf %4, %5 : vector<1x8x16x4xf32>
    %7 = vector.broadcast %3 : vector<1x1x1x4xf32> to vector<1x8x16x4xf32>
    %8 = arith.addf %6, %7 : vector<1x8x16x4xf32>
    %cst = arith.constant 0.000000e+00 : f32
    %9 = vector.broadcast %cst : f32 to vector<1x8x16x4xf32>
    %10 = arith.maximumf %8, %9 : vector<1x8x16x4xf32>
    %c0_7 = arith.constant 0 : index
    %c0_8 = arith.constant 0 : index
    %c0_9 = arith.constant 0 : index
    %c0_10 = arith.constant 0 : index
    %11 = vector.load %arg2[%c0_7, %c0_8, %c0_9, %c0_10] : memref<1x1x16x4xf32, #tpu.memory_space<vmem>>, vector<1x1x16x4xf32>
    %12 = vector.broadcast %1 : vector<1x1x1x4xf32> to vector<1x1x16x4xf32>
    %13 = arith.mulf %11, %12 : vector<1x1x16x4xf32>
    %14 = vector.broadcast %3 : vector<1x1x1x4xf32> to vector<1x1x16x4xf32>
    %15 = arith.addf %13, %14 : vector<1x1x16x4xf32>
    %cst_11 = arith.constant 0.000000e+00 : f32
    %16 = vector.broadcast %cst_11 : f32 to vector<1x1x16x4xf32>
    %17 = arith.maximumf %15, %16 : vector<1x1x16x4xf32>
    %c0_12 = arith.constant 0 : index
    %c0_13 = arith.constant 0 : index
    %c0_14 = arith.constant 0 : index
    %c0_15 = arith.constant 0 : index
    %18 = vector.load %arg4[%c0_12, %c0_13, %c0_14, %c0_15] : memref<1x1x16x4xf32, #tpu.memory_space<vmem>>, vector<1x1x16x4xf32>
    %19 = vector.broadcast %1 : vector<1x1x1x4xf32> to vector<1x1x16x4xf32>
    %20 = arith.mulf %18, %19 : vector<1x1x16x4xf32>
    %21 = vector.broadcast %3 : vector<1x1x1x4xf32> to vector<1x1x16x4xf32>
    %22 = arith.addf %20, %21 : vector<1x1x16x4xf32>
    %cst_16 = arith.constant 0.000000e+00 : f32
    %23 = vector.broadcast %cst_16 : f32 to vector<1x1x16x4xf32>
    %24 = arith.maximumf %22, %23 : vector<1x1x16x4xf32>
    %c0_i32 = arith.constant 0 : i32
    %25 = arith.cmpi sgt, %arg1, %c0_i32 : i32
    %26 = arith.extui %25 : i1 to i32
    %27 = arith.sitofp %26 : i32 to f32
    %28 = vector.broadcast %27 : f32 to vector<1x1x16x4xf32>
    %29 = arith.mulf %17, %28 : vector<1x1x16x4xf32>
    %c1_i32 = arith.constant 1 : i32
    %30 = arith.cmpi slt, %arg1, %c1_i32 : i32
    %31 = arith.extui %30 : i1 to i32
    %32 = arith.sitofp %31 : i32 to f32
    %33 = vector.broadcast %32 : f32 to vector<1x1x16x4xf32>
    %34 = arith.mulf %24, %33 : vector<1x1x16x4xf32>
    %35 = tpu.concatenate %29, %10, %34 in 1 : vector<1x1x16x4xf32>, vector<1x8x16x4xf32>, vector<1x1x16x4xf32> -> vector<1x10x16x4xf32>
    %36 = vector.shape_cast %35 : vector<1x10x16x4xf32> to vector<10x16x4xf32>
    %cst_17 = arith.constant 0.000000e+00 : f32
    %37 = vector.broadcast %cst_17 : f32 to vector<10x1x4xf32>
    %38 = vector.extract_strided_slice %36 {offsets = [0, 0, 0], sizes = [10, 15, 4], strides = [1, 1, 1]} : vector<10x16x4xf32> to vector<10x15x4xf32>
    %39 = tpu.concatenate %37, %38 in 1 : vector<10x1x4xf32>, vector<10x15x4xf32> -> vector<10x16x4xf32>
    %40 = vector.extract_strided_slice %36 {offsets = [0, 1, 0], sizes = [10, 15, 4], strides = [1, 1, 1]} : vector<10x16x4xf32> to vector<10x15x4xf32>
    %41 = tpu.concatenate %40, %37 in 1 : vector<10x15x4xf32>, vector<10x1x4xf32> -> vector<10x16x4xf32>
    %c0_18 = arith.constant 0 : index
    %c0_19 = arith.constant 0 : index
    %c0_20 = arith.constant 0 : index
    %c0_21 = arith.constant 0 : index
    %42 = vector.load %arg7[%c0_18, %c0_19, %c0_20, %c0_21] : memref<3x3x4x128xbf16, #tpu.memory_space<vmem>>, vector<3x3x4x128xbf16>
    %cst_22 = arith.constant 0.000000e+00 : f32
    %43 = vector.broadcast %cst_22 : f32 to vector<128x128xf32>
    %44 = arith.truncf %39 : vector<10x16x4xf32> to vector<10x16x4xbf16>
    %45 = vector.extract_strided_slice %44 {offsets = [0, 0, 0], sizes = [8, 16, 4], strides = [1, 1, 1]} : vector<10x16x4xbf16> to vector<8x16x4xbf16>
    %46 = vector.shape_cast %45 : vector<8x16x4xbf16> to vector<128x4xbf16>
    %47 = vector.extract_strided_slice %42 {offsets = [0, 0, 0, 0], sizes = [1, 1, 4, 128], strides = [1, 1, 1, 1]} : vector<3x3x4x128xbf16> to vector<1x1x4x128xbf16>
    %48 = vector.shape_cast %47 : vector<1x1x4x128xbf16> to vector<4x128xbf16>
    %cst_23 = arith.constant dense<0.000000e+00> : vector<128x128xf32>
    %49 = tpu.matmul %46, %48, %cst_23 {dimension_numbers = #tpu.dot_dimension_numbers<[1], [0], [0], [1], [0, 0, 1, 1], [], []>} : vector<128x4xbf16>, vector<4x128xbf16>, vector<128x128xf32> -> vector<128x128xf32>
    %50 = arith.addf %43, %49 : vector<128x128xf32>
    %51 = vector.extract_strided_slice %44 {offsets = [1, 0, 0], sizes = [8, 16, 4], strides = [1, 1, 1]} : vector<10x16x4xbf16> to vector<8x16x4xbf16>
    %52 = vector.shape_cast %51 : vector<8x16x4xbf16> to vector<128x4xbf16>
    %53 = vector.extract_strided_slice %42 {offsets = [1, 0, 0, 0], sizes = [1, 1, 4, 128], strides = [1, 1, 1, 1]} : vector<3x3x4x128xbf16> to vector<1x1x4x128xbf16>
    %54 = vector.shape_cast %53 : vector<1x1x4x128xbf16> to vector<4x128xbf16>
    %cst_24 = arith.constant dense<0.000000e+00> : vector<128x128xf32>
    %55 = tpu.matmul %52, %54, %cst_24 {dimension_numbers = #tpu.dot_dimension_numbers<[1], [0], [0], [1], [0, 0, 1, 1], [], []>} : vector<128x4xbf16>, vector<4x128xbf16>, vector<128x128xf32> -> vector<128x128xf32>
    %56 = arith.addf %50, %55 : vector<128x128xf32>
    %57 = vector.extract_strided_slice %44 {offsets = [2, 0, 0], sizes = [8, 16, 4], strides = [1, 1, 1]} : vector<10x16x4xbf16> to vector<8x16x4xbf16>
    %58 = vector.shape_cast %57 : vector<8x16x4xbf16> to vector<128x4xbf16>
    %59 = vector.extract_strided_slice %42 {offsets = [2, 0, 0, 0], sizes = [1, 1, 4, 128], strides = [1, 1, 1, 1]} : vector<3x3x4x128xbf16> to vector<1x1x4x128xbf16>
    %60 = vector.shape_cast %59 : vector<1x1x4x128xbf16> to vector<4x128xbf16>
    %cst_25 = arith.constant dense<0.000000e+00> : vector<128x128xf32>
    %61 = tpu.matmul %58, %60, %cst_25 {dimension_numbers = #tpu.dot_dimension_numbers<[1], [0], [0], [1], [0, 0, 1, 1], [], []>} : vector<128x4xbf16>, vector<4x128xbf16>, vector<128x128xf32> -> vector<128x128xf32>
    %62 = arith.addf %56, %61 : vector<128x128xf32>
    %63 = arith.truncf %36 : vector<10x16x4xf32> to vector<10x16x4xbf16>
    %64 = vector.extract_strided_slice %63 {offsets = [0, 0, 0], sizes = [8, 16, 4], strides = [1, 1, 1]} : vector<10x16x4xbf16> to vector<8x16x4xbf16>
    %65 = vector.shape_cast %64 : vector<8x16x4xbf16> to vector<128x4xbf16>
    %66 = vector.extract_strided_slice %42 {offsets = [0, 1, 0, 0], sizes = [1, 1, 4, 128], strides = [1, 1, 1, 1]} : vector<3x3x4x128xbf16> to vector<1x1x4x128xbf16>
    %67 = vector.shape_cast %66 : vector<1x1x4x128xbf16> to vector<4x128xbf16>
    %cst_26 = arith.constant dense<0.000000e+00> : vector<128x128xf32>
    %68 = tpu.matmul %65, %67, %cst_26 {dimension_numbers = #tpu.dot_dimension_numbers<[1], [0], [0], [1], [0, 0, 1, 1], [], []>} : vector<128x4xbf16>, vector<4x128xbf16>, vector<128x128xf32> -> vector<128x128xf32>
    %69 = arith.addf %62, %68 : vector<128x128xf32>
    %70 = vector.extract_strided_slice %63 {offsets = [1, 0, 0], sizes = [8, 16, 4], strides = [1, 1, 1]} : vector<10x16x4xbf16> to vector<8x16x4xbf16>
    %71 = vector.shape_cast %70 : vector<8x16x4xbf16> to vector<128x4xbf16>
    %72 = vector.extract_strided_slice %42 {offsets = [1, 1, 0, 0], sizes = [1, 1, 4, 128], strides = [1, 1, 1, 1]} : vector<3x3x4x128xbf16> to vector<1x1x4x128xbf16>
    %73 = vector.shape_cast %72 : vector<1x1x4x128xbf16> to vector<4x128xbf16>
    %cst_27 = arith.constant dense<0.000000e+00> : vector<128x128xf32>
    %74 = tpu.matmul %71, %73, %cst_27 {dimension_numbers = #tpu.dot_dimension_numbers<[1], [0], [0], [1], [0, 0, 1, 1], [], []>} : vector<128x4xbf16>, vector<4x128xbf16>, vector<128x128xf32> -> vector<128x128xf32>
    %75 = arith.addf %69, %74 : vector<128x128xf32>
    %76 = vector.extract_strided_slice %63 {offsets = [2, 0, 0], sizes = [8, 16, 4], strides = [1, 1, 1]} : vector<10x16x4xbf16> to vector<8x16x4xbf16>
    %77 = vector.shape_cast %76 : vector<8x16x4xbf16> to vector<128x4xbf16>
    %78 = vector.extract_strided_slice %42 {offsets = [2, 1, 0, 0], sizes = [1, 1, 4, 128], strides = [1, 1, 1, 1]} : vector<3x3x4x128xbf16> to vector<1x1x4x128xbf16>
    %79 = vector.shape_cast %78 : vector<1x1x4x128xbf16> to vector<4x128xbf16>
    %cst_28 = arith.constant dense<0.000000e+00> : vector<128x128xf32>
    %80 = tpu.matmul %77, %79, %cst_28 {dimension_numbers = #tpu.dot_dimension_numbers<[1], [0], [0], [1], [0, 0, 1, 1], [], []>} : vector<128x4xbf16>, vector<4x128xbf16>, vector<128x128xf32> -> vector<128x128xf32>
    %81 = arith.addf %75, %80 : vector<128x128xf32>
    %82 = arith.truncf %41 : vector<10x16x4xf32> to vector<10x16x4xbf16>
    %83 = vector.extract_strided_slice %82 {offsets = [0, 0, 0], sizes = [8, 16, 4], strides = [1, 1, 1]} : vector<10x16x4xbf16> to vector<8x16x4xbf16>
    %84 = vector.shape_cast %83 : vector<8x16x4xbf16> to vector<128x4xbf16>
    %85 = vector.extract_strided_slice %42 {offsets = [0, 2, 0, 0], sizes = [1, 1, 4, 128], strides = [1, 1, 1, 1]} : vector<3x3x4x128xbf16> to vector<1x1x4x128xbf16>
    %86 = vector.shape_cast %85 : vector<1x1x4x128xbf16> to vector<4x128xbf16>
    %cst_29 = arith.constant dense<0.000000e+00> : vector<128x128xf32>
    %87 = tpu.matmul %84, %86, %cst_29 {dimension_numbers = #tpu.dot_dimension_numbers<[1], [0], [0], [1], [0, 0, 1, 1], [], []>} : vector<128x4xbf16>, vector<4x128xbf16>, vector<128x128xf32> -> vector<128x128xf32>
    %88 = arith.addf %81, %87 : vector<128x128xf32>
    %89 = vector.extract_strided_slice %82 {offsets = [1, 0, 0], sizes = [8, 16, 4], strides = [1, 1, 1]} : vector<10x16x4xbf16> to vector<8x16x4xbf16>
    %90 = vector.shape_cast %89 : vector<8x16x4xbf16> to vector<128x4xbf16>
    %91 = vector.extract_strided_slice %42 {offsets = [1, 2, 0, 0], sizes = [1, 1, 4, 128], strides = [1, 1, 1, 1]} : vector<3x3x4x128xbf16> to vector<1x1x4x128xbf16>
    %92 = vector.shape_cast %91 : vector<1x1x4x128xbf16> to vector<4x128xbf16>
    %cst_30 = arith.constant dense<0.000000e+00> : vector<128x128xf32>
    %93 = tpu.matmul %90, %92, %cst_30 {dimension_numbers = #tpu.dot_dimension_numbers<[1], [0], [0], [1], [0, 0, 1, 1], [], []>} : vector<128x4xbf16>, vector<4x128xbf16>, vector<128x128xf32> -> vector<128x128xf32>
    %94 = arith.addf %88, %93 : vector<128x128xf32>
    %95 = vector.extract_strided_slice %82 {offsets = [2, 0, 0], sizes = [8, 16, 4], strides = [1, 1, 1]} : vector<10x16x4xbf16> to vector<8x16x4xbf16>
    %96 = vector.shape_cast %95 : vector<8x16x4xbf16> to vector<128x4xbf16>
    %97 = vector.extract_strided_slice %42 {offsets = [2, 2, 0, 0], sizes = [1, 1, 4, 128], strides = [1, 1, 1, 1]} : vector<3x3x4x128xbf16> to vector<1x1x4x128xbf16>
    %98 = vector.shape_cast %97 : vector<1x1x4x128xbf16> to vector<4x128xbf16>
    %cst_31 = arith.constant dense<0.000000e+00> : vector<128x128xf32>
    %99 = tpu.matmul %96, %98, %cst_31 {dimension_numbers = #tpu.dot_dimension_numbers<[1], [0], [0], [1], [0, 0, 1, 1], [], []>} : vector<128x4xbf16>, vector<4x128xbf16>, vector<128x128xf32> -> vector<128x128xf32>
    %100 = arith.addf %94, %99 : vector<128x128xf32>
    %101 = vector.shape_cast %100 : vector<128x128xf32> to vector<1x8x16x128xf32>
    %c0_32 = arith.constant 0 : index
    %c0_33 = arith.constant 0 : index
    %c0_34 = arith.constant 0 : index
    %c0_35 = arith.constant 0 : index
    %102 = vector.load %arg8[%c0_32, %c0_33, %c0_34, %c0_35] : memref<1x8x16x128xf32, #tpu.memory_space<vmem>>, vector<1x8x16x128xf32>
    tpu.vector_store %arg8[%c0_32, %c0_33, %c0_34, %c0_35], %101 {strides = array<i32>} : memref<1x8x16x128xf32, #tpu.memory_space<vmem>>, vector<1x8x16x128xf32>,
    return
  }
  func.func @transform_0(%arg0: i32, %arg1: i32) -> (i32, i32, i32, i32) {
    %c8_i32 = arith.constant 8 : i32
    %0 = arith.muli %arg1, %c8_i32 : i32
    %c1_i32 = arith.constant 1 : i32
    %1 = arith.subi %0, %c1_i32 : i32
    %c0_i32 = arith.constant 0 : i32
    %2 = arith.maxsi %1, %c0_i32 : i32
    %c0_i32_0 = arith.constant 0 : i32
    %c0_i32_1 = arith.constant 0 : i32
    %c0_i32_2 = arith.constant 0 : i32
    return %arg0, %2, %c0_i32_0, %c0_i32_1 : i32, i32, i32, i32
  }
  func.func @transform_1(%arg0: i32, %arg1: i32) -> (i32, i32, i32, i32) {
    %c0_i32 = arith.constant 0 : i32
    %c0_i32_0 = arith.constant 0 : i32
    %c0_i32_1 = arith.constant 0 : i32
    return %arg0, %arg1, %c0_i32, %c0_i32_0 : i32, i32, i32, i32
  }
  func.func @transform_2(%arg0: i32, %arg1: i32) -> (i32, i32, i32, i32) {
    %c1_i32 = arith.constant 1 : i32
    %0 = arith.addi %arg1, %c1_i32 : i32
    %c8_i32 = arith.constant 8 : i32
    %1 = arith.muli %0, %c8_i32 : i32
    %c15_i32 = arith.constant 15 : i32
    %2 = arith.minsi %1, %c15_i32 : i32
    %c0_i32 = arith.constant 0 : i32
    %c0_i32_0 = arith.constant 0 : i32
    %c0_i32_1 = arith.constant 0 : i32
    return %arg0, %2, %c0_i32, %c0_i32_0 : i32, i32, i32, i32
  }
  func.func @transform_3(%arg0: i32, %arg1: i32) -> (i32, i32) {
    %c0_i32 = arith.constant 0 : i32
    %c0_i32_0 = arith.constant 0 : i32
    %c0_i32_1 = arith.constant 0 : i32
    return %c0_i32, %c0_i32_0 : i32, i32
  }
  func.func @transform_4(%arg0: i32, %arg1: i32) -> (i32, i32) {
    %c0_i32 = arith.constant 0 : i32
    %c0_i32_0 = arith.constant 0 : i32
    %c0_i32_1 = arith.constant 0 : i32
    return %c0_i32, %c0_i32_0 : i32, i32
  }
  func.func @transform_5(%arg0: i32, %arg1: i32) -> (i32, i32, i32, i32) {
    %c0_i32 = arith.constant 0 : i32
    %c0_i32_0 = arith.constant 0 : i32
    %c0_i32_1 = arith.constant 0 : i32
    %c0_i32_2 = arith.constant 0 : i32
    %c0_i32_3 = arith.constant 0 : i32
    return %c0_i32, %c0_i32_0, %c0_i32_1, %c0_i32_2 : i32, i32, i32, i32
  }
  func.func @transform_6(%arg0: i32, %arg1: i32) -> (i32, i32, i32, i32) {
    %c0_i32 = arith.constant 0 : i32
    %c0_i32_0 = arith.constant 0 : i32
    %c0_i32_1 = arith.constant 0 : i32
    return %arg0, %arg1, %c0_i32, %c0_i32_0 : i32, i32, i32, i32
  }
}

</mosaic_0001>

<llo_original>
// kernel: tpu_custom_call.1
$region0: #{tpu_custom_call.1}
  #allocation0 [shape = 'u32[]', space=smem, size = 0x4, offset = 0x4, fixed_abs, tag = 'smem constant byte address 0x4 - core index']
  #allocation1 [shape = 'u32[144,128]{1,0:T(1,128)}', space=vmem, size = 0x12000, scoped, tag = 'internal scratch']
  %s0 = inlined_call_operand.vmem [shape: f32[2,16,16,4], index: 0, kind: input, shape index: {}]
  %s1 = inlined_call_operand.vmem [shape: f32[2,16,16,4], index: 1, kind: input, shape index: {}]
  %s2 = inlined_call_operand.vmem [shape: f32[2,16,16,4], index: 2, kind: input, shape index: {}]
  %s3 = inlined_call_operand.vmem [shape: f32[1,4], index: 3, kind: input, shape index: {}]
  %s4 = inlined_call_operand.vmem [shape: f32[1,4], index: 4, kind: input, shape index: {}]
  %s5 = inlined_call_operand.vmem [shape: bf16[3,3,4,128], index: 5, kind: input, shape index: {}]
  %s6 = inlined_call_operand.hbm [shape: f32[2,16,16,128], index: 6, kind: output, shape index: {}]
  %s7 = sld [smem:[#allocation0]]
  $region57: #{tpu_custom_call.1} parent=0
    _
  %s9 = ssub.s32 1, %s7
  %s10 = scalar_select 0, %s9, %s7
  $region1: #{tpu_custom_call.1} parent=0
    #allocation2 [shape = 'u8[131072]{0}', space=vmem, size = 0x20000, scoped, tag = 'output window, operand 0']
    #allocation3 [shape = 's32[2]{0}', space=sflag, size = 0x8, scoped, tag = 'scoped memory for tpu_custom_call.1']
    %11 = vsyncpa [#allocation3], 0
    %s12 = scalar_lea.sflag [#allocation3], 1
    %13 = vsyncpa %s12, 0
    loop: start=0, step=1, limit=6
    $region2: #{tpu_custom_call.1} parent=1 // loop_pre_header
      _
    $region3: #{tpu_custom_call.1} parent=1 // loop_header
      %s15 = sphi 0, %s19
      %p16 = scmp.ge.s32.totalorder %s15, 6
      %s22 = sphi 0, %s34
      %s23 = sphi 0, %s30
      %s24 = sphi 0, %s22
      %s25 = sphi 0, %s23
      %s26 = sphi 0, %s24
      %s27 = sphi 0, %s25
      %s47 = sphi 0, %s49
      %s50 = sphi 0, %s47
      %s51 = sphi 0, %s50
      %s67 = sphi 0, %s51
      %s75 = sphi 0, %s77
      %s78 = sphi 0, %s75
      %s79 = sphi 0, %s78
      %s95 = sphi 0, %s79
      %s111 = sphi 0, %s113
      %s114 = sphi 0, %s111
      %s115 = sphi 0, %s114
      %s131 = sphi 0, %s115
      %s135 = sphi 0, %s135
      %s137 = sphi 0, %s135
      %s138 = sphi 0, %s137
      %s152 = sphi 0, %s138
      %s156 = sphi 0, %s156
      %s158 = sphi 0, %s156
      %s159 = sphi 0, %s158
      %s173 = sphi 0, %s159
      %s177 = sphi 0, %s177
      %s179 = sphi 0, %s177
      %s180 = sphi 0, %s179
      %s194 = sphi 0, %s180
      %s202 = sphi 0, %s204
      %s205 = sphi 0, %s202
      %s206 = sphi 0, %s205
      %s222 = sphi 0, %s206
    $region4: #{tpu_custom_call.1} parent=1 // loop_header_branch
      %18 = sbr.rel (%p16) target = $region8
    $region5: #{tpu_custom_call.1} parent=1 // loop_body
      %s20 = ssub.s32 %s15, 1
      %s21 = ssub.s32 %s15, 2
      %s28 = sadd.s32 1, %s23
      %p29 = scmp.ge.s32.totalorder %s28, 2
      %s30 = scalar_select %p29, 0, %s28
      %s31 = sadd.s32 1, %s22
      %s32 = scalar_select %p29, %s31, %s22
      %p33 = scmp.ge.s32.totalorder %s32, 2
      %s34 = scalar_select %p33, 0, %s32
      %s35 = smul.u32 %s23, 8
      %s36 = ssub.s32 %s35, 1
      %p37 = scmp.gt.s32.totalorder %s36, 0
      %s38 = scalar_select %p37, %s36, 0
      %s39 = smul.u32 %s30, 8
      %s40 = ssub.s32 %s39, 1
      %p41 = scmp.gt.s32.totalorder %s40, 0
      %s42 = scalar_select %p41, %s40, 0
      %s43 = ssub.s32 %s22, %s34
      %s44 = ssub.s32 %s38, %s42
      %s45 = sor.u32 %s43, %s44
      %p46 = scmp.eq.s32.totalorder %s45, 0
      %s48 = sadd.s32 %s47, 1
      %s49 = scalar_select %p46, %s47, %s48
      %p52 = pneg %p46
      %p53 = scmp.eq.s32.totalorder %s15, 3
      %p54 = por %p52, %p53
      %p55 = scmp.ne.s32.totalorder %s47, %s50
      %p56 = scmp.eq.s32.totalorder %s15, 0
      %p57 = por %p55, %p56
      %p58 = scmp.ne.s32.totalorder %s47, %s50
      %p59 = scmp.eq.s32.totalorder %s20, 3
      %p60 = por %p58, %p59
      %p61 = scmp.ne.s32.totalorder %s50, %s51
      %p62 = scmp.eq.s32.totalorder %s20, 0
      %p63 = por %p61, %p62
      %p64 = scmp.ne.s32.totalorder %s50, %s51
      %p65 = scmp.eq.s32.totalorder %s21, 3
      %p66 = por %p64, %p65
      %p68 = scmp.ne.s32.totalorder %s51, %s67
      %p69 = scmp.eq.s32.totalorder %s21, 0
      %p70 = por %p68, %p69
      %s71 = ssub.s32 %s22, %s34
      %s72 = ssub.s32 %s23, %s30
      %s73 = sor.u32 %s71, %s72
      %p74 = scmp.eq.s32.totalorder %s73, 0
      %s76 = sadd.s32 %s75, 1
      %s77 = scalar_select %p74, %s75, %s76
      %p80 = pneg %p74
      %p81 = scmp.eq.s32.totalorder %s15, 3
      %p82 = por %p80, %p81
      %p83 = scmp.ne.s32.totalorder %s75, %s78
      %p84 = scmp.eq.s32.totalorder %s15, 0
      %p85 = por %p83, %p84
      %p86 = scmp.ne.s32.totalorder %s75, %s78
      %p87 = scmp.eq.s32.totalorder %s20, 3
      %p88 = por %p86, %p87
      %p89 = scmp.ne.s32.totalorder %s78, %s79
      %p90 = scmp.eq.s32.totalorder %s20, 0
      %p91 = por %p89, %p90
      %p92 = scmp.ne.s32.totalorder %s78, %s79
      %p93 = scmp.eq.s32.totalorder %s21, 3
      %p94 = por %p92, %p93
      %p96 = scmp.ne.s32.totalorder %s79, %s95
      %p97 = scmp.eq.s32.totalorder %s21, 0
      %p98 = por %p96, %p97
      %s99 = sadd.s32 %s23, 1
      %s100 = smul.u32 %s99, 8
      %p101 = scmp.lt.s32.totalorder %s100, 15
      %s102 = scalar_select %p101, %s100, 15
      %s103 = sadd.s32 %s30, 1
      %s104 = smul.u32 %s103, 8
      %p105 = scmp.lt.s32.totalorder %s104, 15
      %s106 = scalar_select %p105, %s104, 15
      %s107 = ssub.s32 %s22, %s34
      %s108 = ssub.s32 %s102, %s106
      %s109 = sor.u32 %s107, %s108
      %p110 = scmp.eq.s32.totalorder %s109, 0
      %s112 = sadd.s32 %s111, 1
      %s113 = scalar_select %p110, %s111, %s112
      %p116 = pneg %p110
      %p117 = scmp.eq.s32.totalorder %s15, 3
      %p118 = por %p116, %p117
      %p119 = scmp.ne.s32.totalorder %s111, %s114
      %p120 = scmp.eq.s32.totalorder %s15, 0
      %p121 = por %p119, %p120
      %p122 = scmp.ne.s32.totalorder %s111, %s114
      %p123 = scmp.eq.s32.totalorder %s20, 3
      %p124 = por %p122, %p123
      %p125 = scmp.ne.s32.totalorder %s114, %s115
      %p126 = scmp.eq.s32.totalorder %s20, 0
      %p127 = por %p125, %p126
      %p128 = scmp.ne.s32.totalorder %s114, %s115
      %p129 = scmp.eq.s32.totalorder %s21, 3
      %p130 = por %p128, %p129
      %p132 = scmp.ne.s32.totalorder %s115, %s131
      %p133 = scmp.eq.s32.totalorder %s21, 0
      %p134 = por %p132, %p133
      %s136 = sadd.s32 %s135, 1
      %p139 = scmp.eq.s32.totalorder %s15, 3
      %p140 = scmp.ne.s32.totalorder %s135, %s137
      %p141 = scmp.eq.s32.totalorder %s15, 0
      %p142 = por %p140, %p141
      %p143 = scmp.ne.s32.totalorder %s135, %s137
      %p144 = scmp.eq.s32.totalorder %s20, 3
      %p145 = por %p143, %p144
      %p146 = scmp.ne.s32.totalorder %s137, %s138
      %p147 = scmp.eq.s32.totalorder %s20, 0
      %p148 = por %p146, %p147
      %p149 = scmp.ne.s32.totalorder %s137, %s138
      %p150 = scmp.eq.s32.totalorder %s21, 3
      %p151 = por %p149, %p150
      %p153 = scmp.ne.s32.totalorder %s138, %s152
      %p154 = scmp.eq.s32.totalorder %s21, 0
      %p155 = por %p153, %p154
      %s157 = sadd.s32 %s156, 1
      %p160 = scmp.eq.s32.totalorder %s15, 3
      %p161 = scmp.ne.s32.totalorder %s156, %s158
      %p162 = scmp.eq.s32.totalorder %s15, 0
      %p163 = por %p161, %p162
      %p164 = scmp.ne.s32.totalorder %s156, %s158
      %p165 = scmp.eq.s32.totalorder %s20, 3
      %p166 = por %p164, %p165
      %p167 = scmp.ne.s32.totalorder %s158, %s159
      %p168 = scmp.eq.s32.totalorder %s20, 0
      %p169 = por %p167, %p168
      %p170 = scmp.ne.s32.totalorder %s158, %s159
      %p171 = scmp.eq.s32.totalorder %s21, 3
      %p172 = por %p170, %p171
      %p174 = scmp.ne.s32.totalorder %s159, %s173
      %p175 = scmp.eq.s32.totalorder %s21, 0
      %p176 = por %p174, %p175
      %s178 = sadd.s32 %s177, 1
      %p181 = scmp.eq.s32.totalorder %s15, 3
      %p182 = scmp.ne.s32.totalorder %s177, %s179
      %p183 = scmp.eq.s32.totalorder %s15, 0
      %p184 = por %p182, %p183
      %p185 = scmp.ne.s32.totalorder %s177, %s179
      %p186 = scmp.eq.s32.totalorder %s20, 3
      %p187 = por %p185, %p186
      %p188 = scmp.ne.s32.totalorder %s179, %s180
      %p189 = scmp.eq.s32.totalorder %s20, 0
      %p190 = por %p188, %p189
      %p191 = scmp.ne.s32.totalorder %s179, %s180
      %p192 = scmp.eq.s32.totalorder %s21, 3
      %p193 = por %p191, %p192
      %p195 = scmp.ne.s32.totalorder %s180, %s194
      %p196 = scmp.eq.s32.totalorder %s21, 0
      %p197 = por %p195, %p196
      %s198 = ssub.s32 %s22, %s34
      %s199 = ssub.s32 %s23, %s30
      %s200 = sor.u32 %s198, %s199
      %p201 = scmp.eq.s32.totalorder %s200, 0
      %s203 = sadd.s32 %s202, 1
      %s204 = scalar_select %p201, %s202, %s203
      %p207 = pneg %p201
      %p208 = scmp.eq.s32.totalorder %s15, 3
      %p209 = por %p207, %p208
      %p210 = scmp.ne.s32.totalorder %s202, %s205
      %p211 = scmp.eq.s32.totalorder %s15, 0
      %p212 = por %p210, %p211
      %p213 = scmp.ne.s32.totalorder %s202, %s205
      %p214 = scmp.eq.s32.totalorder %s20, 3
      %p215 = por %p213, %p214
      %p216 = scmp.ne.s32.totalorder %s205, %s206
      %p217 = scmp.eq.s32.totalorder %s20, 0
      %p218 = por %p216, %p217
      %p219 = scmp.ne.s32.totalorder %s205, %s206
      %p220 = scmp.eq.s32.totalorder %s21, 3
      %p221 = por %p219, %p220
      %p223 = scmp.ne.s32.totalorder %s206, %s222
      %p224 = scmp.eq.s32.totalorder %s21, 0
      %p225 = por %p223, %p224
      %p226 = scmp.le.s32.totalorder 1, %s15
      %p227 = scmp.lt.s32.totalorder %s15, 5
      %p228 = pnand %p226, %p227
      %p229 = pneg %p228
      // Predicated region
      $region9: #{tpu_custom_call.1} parent=5 // pred_check
        _
      $region10: #{tpu_custom_call.1} parent=5 // pred_check_branch
        %231 = sbr.rel (%p228) target = $region12
      $region11: #{tpu_custom_call.1} parent=5 // pred_region
        %s232 = ssub.s32 %s15, 1
        // Predicated region
        $region13: #{tpu_custom_call.1} parent=11 // pred_check
          %p233 = pneg %p148
        $region14: #{tpu_custom_call.1} parent=11 // pred_check_branch
          %235 = sbr.rel (%p233) target = $region16
        $region15: #{tpu_custom_call.1} parent=11 // pred_region
          _
        $region16: #{tpu_custom_call.1} parent=11 // pred_fallthru
          _
        // Predicated region
        $region17: #{tpu_custom_call.1} parent=11 // pred_check
          %p236 = pneg %p169
        $region18: #{tpu_custom_call.1} parent=11 // pred_check_branch
          %238 = sbr.rel (%p236) target = $region20
        $region19: #{tpu_custom_call.1} parent=11 // pred_region
          _
        $region20: #{tpu_custom_call.1} parent=11 // pred_fallthru
          _
        // Predicated region
        $region21: #{tpu_custom_call.1} parent=11 // pred_check
          %p239 = pneg %p190
        $region22: #{tpu_custom_call.1} parent=11 // pred_check_branch
          %241 = sbr.rel (%p239) target = $region24
        $region23: #{tpu_custom_call.1} parent=11 // pred_region
          _
        $region24: #{tpu_custom_call.1} parent=11 // pred_fallthru
          _
      $region12: #{tpu_custom_call.1} parent=5 // pred_fallthru
        _
      %p242 = scmp.lt.s32.totalorder %s15, 4
      // Predicated region
      $region25: #{tpu_custom_call.1} parent=5 // pred_check
        %p243 = pneg %p242
      $region26: #{tpu_custom_call.1} parent=5 // pred_check_branch
        %245 = sbr.rel (%p243) target = $region28
      $region27: #{tpu_custom_call.1} parent=5 // pred_region
        // Predicated region
        $region29: #{tpu_custom_call.1} parent=27 // pred_check
          %p246 = pneg %p57
        $region30: #{tpu_custom_call.1} parent=27 // pred_check_branch
          %248 = sbr.rel (%p246) target = $region32
        $region31: #{tpu_custom_call.1} parent=27 // pred_region
          %s249 = smul.u32 %s23, 8
          %s250 = ssub.s32 %s249, 1
          %p251 = scmp.gt.s32.totalorder %s250, 0
          %s252 = scalar_select %p251, %s250, 0
          %p253 = scmp.lt.s32.totalorder %s22, 1
          %s254 = scalar_select %p253, %s22, 1
          %p255 = scmp.lt.s32.totalorder %s252, 15
          %s256 = scalar_select %p255, %s252, 15
          %s257 = smul.addr %s256, 2
          %s258 = smul.addr %s254, 32
          %s259 = sadd.s32 %s257, %s258
          %s260 = smul.addr %s259, 8
          %s261 = scalar_lea.vmem %s0, %s260
          %s262 = smul.u32 %s23, 8
          %s263 = ssub.s32 %s262, 1
          %p264 = scmp.gt.s32.totalorder %s263, 0
          %s265 = scalar_select %p264, %s263, 0
        $region32: #{tpu_custom_call.1} parent=27 // pred_fallthru
          _
        // Predicated region
        $region33: #{tpu_custom_call.1} parent=27 // pred_check
          %p266 = pneg %p85
        $region34: #{tpu_custom_call.1} parent=27 // pred_check_branch
          %268 = sbr.rel (%p266) target = $region36
        $region35: #{tpu_custom_call.1} parent=27 // pred_region
          %s269 = smul.u32 8, %s23
          %p270 = scmp.lt.s32.totalorder %s22, 1
          %s271 = scalar_select %p270, %s22, 1
          %p272 = scmp.lt.s32.totalorder %s269, 15
          %s273 = scalar_select %p272, %s269, 15
          %s274 = smul.addr %s273, 2
          %s275 = smul.addr %s271, 32
          %s276 = sadd.s32 %s274, %s275
          %s277 = smul.addr %s276, 8
          %s278 = scalar_lea.vmem %s1, %s277
          %s279 = smul.u32 8, %s23
        $region36: #{tpu_custom_call.1} parent=27 // pred_fallthru
          _
        // Predicated region
        $region37: #{tpu_custom_call.1} parent=27 // pred_check
          %p280 = pneg %p121
        $region38: #{tpu_custom_call.1} parent=27 // pred_check_branch
          %282 = sbr.rel (%p280) target = $region40
        $region39: #{tpu_custom_call.1} parent=27 // pred_region
          %s283 = sadd.s32 %s23, 1
          %s284 = smul.u32 %s283, 8
          %p285 = scmp.lt.s32.totalorder %s284, 15
          %s286 = scalar_select %p285, %s284, 15
          %p287 = scmp.lt.s32.totalorder %s22, 1
          %s288 = scalar_select %p287, %s22, 1
          %p289 = scmp.lt.s32.totalorder %s286, 15
          %s290 = scalar_select %p289, %s286, 15
          %s291 = smul.addr %s290, 2
          %s292 = smul.addr %s288, 32
          %s293 = sadd.s32 %s291, %s292
          %s294 = smul.addr %s293, 8
          %s295 = scalar_lea.vmem %s2, %s294
          %s296 = sadd.s32 %s23, 1
          %s297 = smul.u32 %s296, 8
          %p298 = scmp.lt.s32.totalorder %s297, 15
          %s299 = scalar_select %p298, %s297, 15
        $region40: #{tpu_custom_call.1} parent=27 // pred_fallthru
          _
      $region28: #{tpu_custom_call.1} parent=5 // pred_fallthru
        _
      %p300 = scmp.le.s32.totalorder 1, %s15
      %p301 = scmp.lt.s32.totalorder %s15, 5
      %p302 = pnand %p300, %p301
      %p303 = pneg %p302
      // Predicated region
      $region41: #{tpu_custom_call.1} parent=5 // pred_check
        _
      $region42: #{tpu_custom_call.1} parent=5 // pred_check_branch
        %305 = sbr.rel (%p302) target = $region44
      $region43: #{tpu_custom_call.1} parent=5 // pred_region
        %s306 = ssub.s32 %s15, 1
        %s307 = smul.u32 %s25, 8
        %s308 = ssub.s32 %s307, 1
        %p309 = scmp.gt.s32.totalorder %s308, 0
        %s310 = scalar_select %p309, %s308, 0
        %p311 = scmp.lt.s32.totalorder %s24, 1
        %s312 = scalar_select %p311, %s24, 1
        %p313 = scmp.lt.s32.totalorder %s310, 15
        %s314 = scalar_select %p313, %s310, 15
        %s315 = smul.addr %s314, 2
        %s316 = smul.addr %s312, 32
        %s317 = sadd.s32 %s315, %s316
        %s318 = smul.addr %s317, 8
        %s319 = scalar_lea.vmem %s0, %s318
        %p320 = pneg %p63
        %p321 = pneg %p60
        %s322 = smul.u32 8, %s25
        %p323 = scmp.lt.s32.totalorder %s24, 1
        %s324 = scalar_select %p323, %s24, 1
        %p325 = scmp.lt.s32.totalorder %s322, 15
        %s326 = scalar_select %p325, %s322, 15
        %s327 = smul.addr %s326, 2
        %s328 = smul.addr %s324, 32
        %s329 = sadd.s32 %s327, %s328
        %s330 = smul.addr %s329, 8
        %s331 = scalar_lea.vmem %s1, %s330
        %p332 = pneg %p91
        %p333 = pneg %p88
        %s334 = sadd.s32 %s25, 1
        %s335 = smul.u32 %s334, 8
        %p336 = scmp.lt.s32.totalorder %s335, 15
        %s337 = scalar_select %p336, %s335, 15
        %p338 = scmp.lt.s32.totalorder %s24, 1
        %s339 = scalar_select %p338, %s24, 1
        %p340 = scmp.lt.s32.totalorder %s337, 15
        %s341 = scalar_select %p340, %s337, 15
        %s342 = smul.addr %s341, 2
        %s343 = smul.addr %s339, 32
        %s344 = sadd.s32 %s342, %s343
        %s345 = smul.addr %s344, 8
        %s346 = scalar_lea.vmem %s2, %s345
        %p347 = pneg %p127
        %p348 = pneg %p124
        %p349 = pneg %p148
        %p350 = pneg %p145
        %p351 = pneg %p169
        %p352 = pneg %p166
        %p353 = pneg %p190
        %p354 = pneg %p187
        %p355 = pneg %p218
        %p356 = pneg %p215
        %s357 = sand.u32 %s205, 1
        %s358 = scalar_lea.sflag [#allocation3], %s357
        %s359 = sand.u32 %s205, 1
        %s360 = smul.addr %s359, 128
        %s361 = scalar_lea.vmem [#allocation2], %s360
        %s362 = smul.u32 %s25, 8
        %s363 = ssub.s32 %s362, 1
        %p364 = scmp.gt.s32.totalorder %s363, 0
        %s365 = scalar_select %p364, %s363, 0
        %p366 = scmp.lt.s32.totalorder %s24, 1
        %s367 = scalar_select %p366, %s24, 1
        %p368 = scmp.lt.s32.totalorder %s365, 15
        %s369 = scalar_select %p368, %s365, 15
        %s370 = smul.addr %s369, 2
        %s371 = smul.addr %s367, 32
        %s372 = sadd.s32 %s370, %s371
        %s373 = smul.addr %s372, 8
        %s374 = scalar_lea.vmem %s0, %s373
        %s375 = smul.u32 %s25, 8
        %s376 = ssub.s32 %s375, 1
        %p377 = scmp.gt.s32.totalorder %s376, 0
        %s378 = scalar_select %p377, %s376, 0
        %s379 = smul.u32 8, %s25
        %p380 = scmp.lt.s32.totalorder %s24, 1
        %s381 = scalar_select %p380, %s24, 1
        %p382 = scmp.lt.s32.totalorder %s379, 15
        %s383 = scalar_select %p382, %s379, 15
        %s384 = smul.addr %s383, 2
        %s385 = smul.addr %s381, 32
        %s386 = sadd.s32 %s384, %s385
        %s387 = smul.addr %s386, 8
        %s388 = scalar_lea.vmem %s1, %s387
        %s389 = smul.u32 8, %s25
        %s390 = sadd.s32 %s25, 1
        %s391 = smul.u32 %s390, 8
        %p392 = scmp.lt.s32.totalorder %s391, 15
        %s393 = scalar_select %p392, %s391, 15
        %p394 = scmp.lt.s32.totalorder %s24, 1
        %s395 = scalar_select %p394, %s24, 1
        %p396 = scmp.lt.s32.totalorder %s393, 15
        %s397 = scalar_select %p396, %s393, 15
        %s398 = smul.addr %s397, 2
        %s399 = smul.addr %s395, 32
        %s400 = sadd.s32 %s398, %s399
        %s401 = smul.addr %s400, 8
        %s402 = scalar_lea.vmem %s2, %s401
        %s403 = sadd.s32 %s25, 1
        %s404 = smul.u32 %s403, 8
        %p405 = scmp.lt.s32.totalorder %s404, 15
        %s406 = scalar_select %p405, %s404, 15
        %s407 = smul.u32 8, %s25
        %v409 = vld [vmem:[%s3] sm:$0x1]
        %v410 = vld [vmem:[%s4] sm:$0x1]
        %v411 = vld [vmem:[%s388] sm:$0xff]
        %v412 = vld [vmem:[%s388 + $0x8] sm:$0xff]
        %v413 = vld [vmem:[%s388 + $0x10] sm:$0xff]
        %v414 = vld [vmem:[%s388 + $0x18] sm:$0xff]
        %v415 = vld [vmem:[%s388 + $0x20] sm:$0xff]
        %v416 = vld [vmem:[%s388 + $0x28] sm:$0xff]
        %v417 = vld [vmem:[%s388 + $0x30] sm:$0xff]
        %v418 = vld [vmem:[%s388 + $0x38] sm:$0xff]
        %v419 = vld [vmem:[%s388 + $0x40] sm:$0xff]
        %v420 = vld [vmem:[%s388 + $0x48] sm:$0xff]
        %v421 = vld [vmem:[%s388 + $0x50] sm:$0xff]
        %v422 = vld [vmem:[%s388 + $0x58] sm:$0xff]
        %v423 = vld [vmem:[%s388 + $0x60] sm:$0xff]
        %v424 = vld [vmem:[%s388 + $0x68] sm:$0xff]
        %v425 = vld [vmem:[%s388 + $0x70] sm:$0xff]
        %v426 = vld [vmem:[%s388 + $0x78] sm:$0xff]
        %v428 = vlaneseq
        %v429 = vshrl.u32 %v428, 7
        %v430 = vsub.s32 0, %v429
        %v431 = vrot.slane %v409, %v430
        %v433 = vmul.f32 %v411, %v431
        %v434 = vmul.f32 %v412, %v431
        %v435 = vmul.f32 %v413, %v431
        %v436 = vmul.f32 %v414, %v431
        %v437 = vmul.f32 %v415, %v431
        %v438 = vmul.f32 %v416, %v431
        %v439 = vmul.f32 %v417, %v431
        %v440 = vmul.f32 %v418, %v431
        %v441 = vmul.f32 %v419, %v431
        %v442 = vmul.f32 %v420, %v431
        %v443 = vmul.f32 %v421, %v431
        %v444 = vmul.f32 %v422, %v431
        %v445 = vmul.f32 %v423, %v431
        %v446 = vmul.f32 %v424, %v431
        %v447 = vmul.f32 %v425, %v431
        %v448 = vmul.f32 %v426, %v431
        %v450 = vlaneseq
        %v451 = vshrl.u32 %v450, 7
        %v452 = vsub.s32 0, %v451
        %v453 = vrot.slane %v410, %v452
        %v455 = vadd.f32 %v433, %v453
        %v456 = vadd.f32 %v434, %v453
        %v457 = vadd.f32 %v435, %v453
        %v458 = vadd.f32 %v436, %v453
        %v459 = vadd.f32 %v437, %v453
        %v460 = vadd.f32 %v438, %v453
        %v461 = vadd.f32 %v439, %v453
        %v462 = vadd.f32 %v440, %v453
        %v463 = vadd.f32 %v441, %v453
        %v464 = vadd.f32 %v442, %v453
        %v465 = vadd.f32 %v443, %v453
        %v466 = vadd.f32 %v444, %v453
        %v467 = vadd.f32 %v445, %v453
        %v468 = vadd.f32 %v446, %v453
        %v469 = vadd.f32 %v447, %v453
        %v470 = vadd.f32 %v448, %v453
        %v471 = vmax.f32 %v455, 0.0
        %v472 = vmax.f32 %v456, 0.0
        %v473 = vmax.f32 %v457, 0.0
        %v474 = vmax.f32 %v458, 0.0
        %v475 = vmax.f32 %v459, 0.0
        %v476 = vmax.f32 %v460, 0.0
        %v477 = vmax.f32 %v461, 0.0
        %v478 = vmax.f32 %v462, 0.0
        %v479 = vmax.f32 %v463, 0.0
        %v480 = vmax.f32 %v464, 0.0
        %v481 = vmax.f32 %v465, 0.0
        %v482 = vmax.f32 %v466, 0.0
        %v483 = vmax.f32 %v467, 0.0
        %v484 = vmax.f32 %v468, 0.0
        %v485 = vmax.f32 %v469, 0.0
        %v486 = vmax.f32 %v470, 0.0
        %v487 = vld [vmem:[%s374] sm:$0xff]
        %v488 = vld [vmem:[%s374 + $0x8] sm:$0xff]
        %v489 = vmul.f32 %v487, %v431
        %v490 = vmul.f32 %v488, %v431
        %v491 = vadd.f32 %v489, %v453
        %v492 = vadd.f32 %v490, %v453
        %v493 = vmax.f32 %v491, 0.0
        %v494 = vmax.f32 %v492, 0.0
        %v495 = vld [vmem:[%s402] sm:$0xff]
        %v496 = vld [vmem:[%s402 + $0x8] sm:$0xff]
        %v497 = vmul.f32 %v495, %v431
        %v498 = vmul.f32 %v496, %v431
        %v499 = vadd.f32 %v497, %v453
        %v500 = vadd.f32 %v498, %v453
        %v501 = vmax.f32 %v499, 0.0
        %v502 = vmax.f32 %v500, 0.0
        %p503 = scmp.gt.s32.totalorder %s25, 0
        %s504 = scalar_select %p503, 1, 0
        %s505 = scvt.s32.f32 %s504
        %v506 = vstv %s505
        %v507 = vmul.f32 %v493, %v506
        %v508 = vmul.f32 %v494, %v506
        %p509 = scmp.lt.s32.totalorder %s25, 1
        %s510 = scalar_select %p509, 1, 0
        %s511 = scvt.s32.f32 %s510
        %v512 = vstv %s511
        %v513 = vmul.f32 %v501, %v512
        %v514 = vmul.f32 %v502, %v512
        %vm535 = vcmask 1040384
        %v536 = vrot.slane %v507, 7
        %v537 = vrot.slane %v508, 7
        %v538 = vsel %vm535, %v536, %v537
        %v539 = vrot.slane %v471, 7
        %v540 = vrot.slane %v472, 7
        %v541 = vsel %vm535, %v539, %v540
        %v542 = vrot.slane %v473, 7
        %v543 = vrot.slane %v474, 7
        %v544 = vsel %vm535, %v542, %v543
        %v545 = vrot.slane %v475, 7
        %v546 = vrot.slane %v476, 7
        %v547 = vsel %vm535, %v545, %v546
        %v548 = vrot.slane %v477, 7
        %v549 = vrot.slane %v478, 7
        %v550 = vsel %vm535, %v548, %v549
        %v551 = vrot.slane %v479, 7
        %v552 = vrot.slane %v480, 7
        %v553 = vsel %vm535, %v551, %v552
        %v554 = vrot.slane %v481, 7
        %v555 = vrot.slane %v482, 7
        %v556 = vsel %vm535, %v554, %v555
        %v557 = vrot.slane %v483, 7
        %v558 = vrot.slane %v484, 7
        %v559 = vsel %vm535, %v557, %v558
        %v560 = vrot.slane %v485, 7
        %v561 = vrot.slane %v486, 7
        %v562 = vsel %vm535, %v560, %v561
        %v563 = vrot.slane %v513, 7
        %v564 = vrot.slane %v514, 7
        %v565 = vsel %vm535, %v563, %v564
        %v586 = vsel %vm535, 0.0, %v536
        %v587 = vsel %vm535, 0.0, %v539
        %v588 = vsel %vm535, 0.0, %v542
        %v589 = vsel %vm535, 0.0, %v545
        %v590 = vsel %vm535, 0.0, %v548
        %v591 = vsel %vm535, 0.0, %v551
        %v592 = vsel %vm535, 0.0, %v554
        %v593 = vsel %vm535, 0.0, %v557
        %v594 = vsel %vm535, 0.0, %v560
        %v595 = vsel %vm535, 0.0, %v563
        %vm596 = vcmask 1046528
        %v597 = vrot.slane %v507, 1
        %v598 = vrot.slane %v508, 1
        %v599 = vsel %vm596, %v597, %v598
        %v600 = vrot.slane %v471, 1
        %v601 = vrot.slane %v472, 1
        %v602 = vsel %vm596, %v600, %v601
        %v603 = vrot.slane %v473, 1
        %v604 = vrot.slane %v474, 1
        %v605 = vsel %vm596, %v603, %v604
        %v606 = vrot.slane %v475, 1
        %v607 = vrot.slane %v476, 1
        %v608 = vsel %vm596, %v606, %v607
        %v609 = vrot.slane %v477, 1
        %v610 = vrot.slane %v478, 1
        %v611 = vsel %vm596, %v609, %v610
        %v612 = vrot.slane %v479, 1
        %v613 = vrot.slane %v480, 1
        %v614 = vsel %vm596, %v612, %v613
        %v615 = vrot.slane %v481, 1
        %v616 = vrot.slane %v482, 1
        %v617 = vsel %vm596, %v615, %v616
        %v618 = vrot.slane %v483, 1
        %v619 = vrot.slane %v484, 1
        %v620 = vsel %vm596, %v618, %v619
        %v621 = vrot.slane %v485, 1
        %v622 = vrot.slane %v486, 1
        %v623 = vsel %vm596, %v621, %v622
        %v624 = vrot.slane %v513, 1
        %v625 = vrot.slane %v514, 1
        %v626 = vsel %vm596, %v624, %v625
        %v647 = vsel %vm596, %v598, 0.0
        %v648 = vsel %vm596, %v601, 0.0
        %v649 = vsel %vm596, %v604, 0.0
        %v650 = vsel %vm596, %v607, 0.0
        %v651 = vsel %vm596, %v610, 0.0
        %v652 = vsel %vm596, %v613, 0.0
        %v653 = vsel %vm596, %v616, 0.0
        %v654 = vsel %vm596, %v619, 0.0
        %v655 = vsel %vm596, %v622, 0.0
        %v656 = vsel %vm596, %v625, 0.0
        %v657 = vld [vmem:[%s5] sm:$0x3]
        %v658 = vld [vmem:[%s5 + $0x2] sm:$0x3]
        %v659 = vld [vmem:[%s5 + $0x4] sm:$0x3]
        %v660 = vld [vmem:[%s5 + $0x6] sm:$0x3]
        %v661 = vld [vmem:[%s5 + $0x8] sm:$0x3]
        %v662 = vld [vmem:[%s5 + $0xa] sm:$0x3]
        %v663 = vld [vmem:[%s5 + $0xc] sm:$0x3]
        %v664 = vld [vmem:[%s5 + $0xe] sm:$0x3]
        %v665 = vld [vmem:[%s5 + $0x10] sm:$0x3]
        %v666 = vpack.c.bf16 %v538, %v586
        %v667 = vpack.c.bf16 %v541, %v587
        %v668 = vpack.c.bf16 %v544, %v588
        %v669 = vpack.c.bf16 %v547, %v589
        %v670 = vpack.c.bf16 %v550, %v590
        %v671 = vpack.c.bf16 %v553, %v591
        %v672 = vpack.c.bf16 %v556, %v592
        %v673 = vpack.c.bf16 %v559, %v593
        %v674 = vpack.c.bf16 %v562, %v594
        %v675 = vpack.c.bf16 %v565, %v595
        %vm676 = vcmask 31744
        %v678 = vsel %vm676, %v667, 0
        %v681 = vsel %vm676, %v668, 0
        %v684 = vsel %vm676, %v669, 0
        %v687 = vsel %vm676, %v670, 0
        %v690 = vsel %vm676, %v671, 0
        %v693 = vsel %vm676, %v672, 0
        %v696 = vsel %vm676, %v673, 0
        %v699 = vsel %vm676, %v674, 0
        %vm701 = vcmask 1041408
        %v703 = vsel %vm701, %v660, 0
        %705 = vmatprep.subr.bf16.mxu0 0
        %706 = vmatpush1.bf16.msra.mxu0 %v703
        %707 = vmatprep.subr.bf16.mxu0 0
        %708 = vmatpush1.bf16.msra.mxu0 0
        %709 = vmatprep.subr.bf16.mxu0 0
        %710 = vmatpush1.bf16.msra.mxu0 0
        %711 = vmatprep.subr.bf16.mxu0 0
        %712 = vmatpush1.bf16.msra.mxu0 0
        %713 = vmatprep.subr.bf16.mxu0 0
        %714 = vmatpush1.bf16.msra.mxu0 0
        %715 = vmatprep.subr.bf16.mxu0 0
        %716 = vmatpush1.bf16.msra.mxu0 0
        %717 = vmatprep.subr.bf16.mxu0 0
        %718 = vmatpush1.bf16.msra.mxu0 0
        %719 = vmatprep.subr.bf16.mxu0 0
        %720 = vmatpush1.bf16.msra.mxu0 0
        %721 = vmatprep.subr.bf16.mxu0 0
        %722 = vmatpush1.bf16.msra.mxu0 0
        %723 = vmatprep.subr.bf16.mxu0 0
        %724 = vmatpush1.bf16.msra.mxu0 0
        %725 = vmatprep.subr.bf16.mxu0 0
        %726 = vmatpush1.bf16.msra.mxu0 0
        %727 = vmatprep.subr.bf16.mxu0 0
        %728 = vmatpush1.bf16.msra.mxu0 0
        %729 = vmatprep.subr.bf16.mxu0 0
        %730 = vmatpush1.bf16.msra.mxu0 0
        %731 = vmatprep.subr.bf16.mxu0 0
        %732 = vmatpush1.bf16.msra.mxu0 0
        %733 = vmatprep.subr.bf16.mxu0 0
        %734 = vmatpush1.bf16.msra.mxu0 0
        %735 = vmatprep.subr.bf16.mxu0 0
        %736 = vmatpush1.bf16.msra.mxu0 0
        %737 = vmatprep.mubr.bf16.mxu0 0
        %738 = vmatmul.mubr.bf16.gmra.mrb[0].mxu0 %v678
        %v739 = vpop.f32.mrb[0].mxu0
        %v740 = vadd.f32 0.0, %v739
        %v741 = vpop.f32.mrb[0].mxu0
        %v742 = vpop.f32.mrb[0].mxu0
        %v743 = vadd.f32 0.0, %v742
        %v744 = vpop.f32.mrb[0].mxu0
        %745 = vmatprep.mubr.bf16.mxu0 0
        %746 = vmatmul.mubr.bf16.gmra.mrb[0].mxu0 %v681
        %v747 = vpop.f32.mrb[0].mxu0
        %v748 = vadd.f32 0.0, %v747
        %v749 = vpop.f32.mrb[0].mxu0
        %v750 = vpop.f32.mrb[0].mxu0
        %v751 = vadd.f32 0.0, %v750
        %v752 = vpop.f32.mrb[0].mxu0
        %753 = vmatprep.mubr.bf16.mxu0 0
        %754 = vmatmul.mubr.bf16.gmra.mrb[0].mxu0 %v684
        %v755 = vpop.f32.mrb[0].mxu0
        %v756 = vadd.f32 0.0, %v755
        %v757 = vpop.f32.mrb[0].mxu0
        %v758 = vpop.f32.mrb[0].mxu0
        %v759 = vadd.f32 0.0, %v758
        %v760 = vpop.f32.mrb[0].mxu0
        %761 = vmatprep.mubr.bf16.mxu0 0
        %762 = vmatmul.mubr.bf16.gmra.mrb[0].mxu0 %v687
        %v763 = vpop.f32.mrb[0].mxu0
        %v764 = vadd.f32 0.0, %v763
        %v765 = vpop.f32.mrb[0].mxu0
        %v766 = vpop.f32.mrb[0].mxu0
        %v767 = vadd.f32 0.0, %v766
        %v768 = vpop.f32.mrb[0].mxu0
        %769 = vmatprep.mubr.bf16.mxu0 0
        %770 = vmatmul.mubr.bf16.gmra.mrb[0].mxu0 %v690
        %v771 = vpop.f32.mrb[0].mxu0
        %v772 = vadd.f32 0.0, %v771
        %v773 = vpop.f32.mrb[0].mxu0
        %v774 = vpop.f32.mrb[0].mxu0
        %v775 = vadd.f32 0.0, %v774
        %v776 = vpop.f32.mrb[0].mxu0
        %777 = vmatprep.mubr.bf16.mxu0 0
        %778 = vmatmul.mubr.bf16.gmra.mrb[0].mxu0 %v693
        %v779 = vpop.f32.mrb[0].mxu0
        %v780 = vadd.f32 0.0, %v779
        %v781 = vpop.f32.mrb[0].mxu0
        %v782 = vpop.f32.mrb[0].mxu0
        %v783 = vadd.f32 0.0, %v782
        %v784 = vpop.f32.mrb[0].mxu0
        %785 = vmatprep.mubr.bf16.mxu0 0
        %786 = vmatmul.mubr.bf16.gmra.mrb[0].mxu0 %v696
        %v787 = vpop.f32.mrb[0].mxu0
        %v788 = vadd.f32 0.0, %v787
        %v789 = vpop.f32.mrb[0].mxu0
        %v790 = vpop.f32.mrb[0].mxu0
        %v791 = vadd.f32 0.0, %v790
        %v792 = vpop.f32.mrb[0].mxu0
        %793 = vmatprep.mubr.bf16.mxu0 0
        %794 = vmatmul.mubr.bf16.gmra.mrb[0].mxu0 %v699
        %v795 = vpop.f32.mrb[0].mxu0
        %v796 = vadd.f32 0.0, %v795
        %v797 = vpop.f32.mrb[0].mxu0
        %v798 = vpop.f32.mrb[0].mxu0
        %v799 = vadd.f32 0.0, %v798
        %v800 = vpop.f32.mrb[0].mxu0
        %801 = vdwg.mxu0
        %v803 = vsel %vm676, %v666, 0
        %v806 = vsel %vm701, %v657, 0
        %808 = vmatprep.subr.bf16.mxu0 0
        %809 = vmatpush1.bf16.msra.mxu0 %v806
        %810 = vmatprep.subr.bf16.mxu0 0
        %811 = vmatpush1.bf16.msra.mxu0 0
        %812 = vmatprep.subr.bf16.mxu0 0
        %813 = vmatpush1.bf16.msra.mxu0 0
        %814 = vmatprep.subr.bf16.mxu0 0
        %815 = vmatpush1.bf16.msra.mxu0 0
        %816 = vmatprep.subr.bf16.mxu0 0
        %817 = vmatpush1.bf16.msra.mxu0 0
        %818 = vmatprep.subr.bf16.mxu0 0
        %819 = vmatpush1.bf16.msra.mxu0 0
        %820 = vmatprep.subr.bf16.mxu0 0
        %821 = vmatpush1.bf16.msra.mxu0 0
        %822 = vmatprep.subr.bf16.mxu0 0
        %823 = vmatpush1.bf16.msra.mxu0 0
        %824 = vmatprep.subr.bf16.mxu0 0
        %825 = vmatpush1.bf16.msra.mxu0 0
        %826 = vmatprep.subr.bf16.mxu0 0
        %827 = vmatpush1.bf16.msra.mxu0 0
        %828 = vmatprep.subr.bf16.mxu0 0
        %829 = vmatpush1.bf16.msra.mxu0 0
        %830 = vmatprep.subr.bf16.mxu0 0
        %831 = vmatpush1.bf16.msra.mxu0 0
        %832 = vmatprep.subr.bf16.mxu0 0
        %833 = vmatpush1.bf16.msra.mxu0 0
        %834 = vmatprep.subr.bf16.mxu0 0
        %835 = vmatpush1.bf16.msra.mxu0 0
        %836 = vmatprep.subr.bf16.mxu0 0
        %837 = vmatpush1.bf16.msra.mxu0 0
        %838 = vmatprep.subr.bf16.mxu0 0
        %839 = vmatpush1.bf16.msra.mxu0 0
        %840 = vmatprep.mubr.bf16.mxu0 0
        %841 = vmatmul.mubr.bf16.gmra.mrb[0].mxu0 %v803
        %v842 = vpop.f32.mrb[0].mxu0
        %v843 = vadd.f32 %v740, %v842
        %v844 = vpop.f32.mrb[0].mxu0
        %v845 = vpop.f32.mrb[0].mxu0
        %v846 = vadd.f32 %v743, %v845
        %v847 = vpop.f32.mrb[0].mxu0
        %848 = vmatprep.mubr.bf16.mxu0 0
        %849 = vmatmul.mubr.bf16.gmra.mrb[0].mxu0 %v678
        %v850 = vpop.f32.mrb[0].mxu0
        %v851 = vadd.f32 %v748, %v850
        %v852 = vpop.f32.mrb[0].mxu0
        %v853 = vpop.f32.mrb[0].mxu0
        %v854 = vadd.f32 %v751, %v853
        %v855 = vpop.f32.mrb[0].mxu0
        %856 = vmatprep.mubr.bf16.mxu0 0
        %857 = vmatmul.mubr.bf16.gmra.mrb[0].mxu0 %v681
        %v858 = vpop.f32.mrb[0].mxu0
        %v859 = vadd.f32 %v756, %v858
        %v860 = vpop.f32.mrb[0].mxu0
        %v861 = vpop.f32.mrb[0].mxu0
        %v862 = vadd.f32 %v759, %v861
        %v863 = vpop.f32.mrb[0].mxu0
        %864 = vmatprep.mubr.bf16.mxu0 0
        %865 = vmatmul.mubr.bf16.gmra.mrb[0].mxu0 %v684
        %v866 = vpop.f32.mrb[0].mxu0
        %v867 = vadd.f32 %v764, %v866
        %v868 = vpop.f32.mrb[0].mxu0
        %v869 = vpop.f32.mrb[0].mxu0
        %v870 = vadd.f32 %v767, %v869
        %v871 = vpop.f32.mrb[0].mxu0
        %872 = vmatprep.mubr.bf16.mxu0 0
        %873 = vmatmul.mubr.bf16.gmra.mrb[0].mxu0 %v687
        %v874 = vpop.f32.mrb[0].mxu0
        %v875 = vadd.f32 %v772, %v874
        %v876 = vpop.f32.mrb[0].mxu0
        %v877 = vpop.f32.mrb[0].mxu0
        %v878 = vadd.f32 %v775, %v877
        %v879 = vpop.f32.mrb[0].mxu0
        %880 = vmatprep.mubr.bf16.mxu0 0
        %881 = vmatmul.mubr.bf16.gmra.mrb[0].mxu0 %v690
        %v882 = vpop.f32.mrb[0].mxu0
        %v883 = vadd.f32 %v780, %v882
        %v884 = vpop.f32.mrb[0].mxu0
        %v885 = vpop.f32.mrb[0].mxu0
        %v886 = vadd.f32 %v783, %v885
        %v887 = vpop.f32.mrb[0].mxu0
        %888 = vmatprep.mubr.bf16.mxu0 0
        %889 = vmatmul.mubr.bf16.gmra.mrb[0].mxu0 %v693
        %v890 = vpop.f32.mrb[0].mxu0
        %v891 = vadd.f32 %v788, %v890
        %v892 = vpop.f32.mrb[0].mxu0
        %v893 = vpop.f32.mrb[0].mxu0
        %v894 = vadd.f32 %v791, %v893
        %v895 = vpop.f32.mrb[0].mxu0
        %896 = vmatprep.mubr.bf16.mxu0 0
        %897 = vmatmul.mubr.bf16.gmra.mrb[0].mxu0 %v696
        %v898 = vpop.f32.mrb[0].mxu0
        %v899 = vadd.f32 %v796, %v898
        %v900 = vpop.f32.mrb[0].mxu0
        %v901 = vpop.f32.mrb[0].mxu0
        %v902 = vadd.f32 %v799, %v901
        %v903 = vpop.f32.mrb[0].mxu0
        %904 = vdwg.mxu0
        %v906 = vsel %vm676, %v675, 0
        %v909 = vsel %vm701, %v663, 0
        %911 = vmatprep.subr.bf16.mxu0 0
        %912 = vmatpush1.bf16.msra.mxu0 %v909
        %913 = vmatprep.subr.bf16.mxu0 0
        %914 = vmatpush1.bf16.msra.mxu0 0
        %915 = vmatprep.subr.bf16.mxu0 0
        %916 = vmatpush1.bf16.msra.mxu0 0
        %917 = vmatprep.subr.bf16.mxu0 0
        %918 = vmatpush1.bf16.msra.mxu0 0
        %919 = vmatprep.subr.bf16.mxu0 0
        %920 = vmatpush1.bf16.msra.mxu0 0
        %921 = vmatprep.subr.bf16.mxu0 0
        %922 = vmatpush1.bf16.msra.mxu0 0
        %923 = vmatprep.subr.bf16.mxu0 0
        %924 = vmatpush1.bf16.msra.mxu0 0
        %925 = vmatprep.subr.bf16.mxu0 0
        %926 = vmatpush1.bf16.msra.mxu0 0
        %927 = vmatprep.subr.bf16.mxu0 0
        %928 = vmatpush1.bf16.msra.mxu0 0
        %929 = vmatprep.subr.bf16.mxu0 0
        %930 = vmatpush1.bf16.msra.mxu0 0
        %931 = vmatprep.subr.bf16.mxu0 0
        %932 = vmatpush1.bf16.msra.mxu0 0
        %933 = vmatprep.subr.bf16.mxu0 0
        %934 = vmatpush1.bf16.msra.mxu0 0
        %935 = vmatprep.subr.bf16.mxu0 0
        %936 = vmatpush1.bf16.msra.mxu0 0
        %937 = vmatprep.subr.bf16.mxu0 0
        %938 = vmatpush1.bf16.msra.mxu0 0
        %939 = vmatprep.subr.bf16.mxu0 0
        %940 = vmatpush1.bf16.msra.mxu0 0
        %941 = vmatprep.subr.bf16.mxu0 0
        %942 = vmatpush1.bf16.msra.mxu0 0
        %943 = vmatprep.mubr.bf16.mxu0 0
        %944 = vmatmul.mubr.bf16.gmra.mrb[0].mxu0 %v681
        %v945 = vpop.f32.mrb[0].mxu0
        %v946 = vadd.f32 0.0, %v945
        %v947 = vpop.f32.mrb[0].mxu0
        %v948 = vpop.f32.mrb[0].mxu0
        %v949 = vadd.f32 0.0, %v948
        %v950 = vpop.f32.mrb[0].mxu0
        %951 = vmatprep.mubr.bf16.mxu0 0
        %952 = vmatmul.mubr.bf16.gmra.mrb[0].mxu0 %v684
        %v953 = vpop.f32.mrb[0].mxu0
        %v954 = vadd.f32 0.0, %v953
        %v955 = vpop.f32.mrb[0].mxu0
        %v956 = vpop.f32.mrb[0].mxu0
        %v957 = vadd.f32 0.0, %v956
        %v958 = vpop.f32.mrb[0].mxu0
        %959 = vmatprep.mubr.bf16.mxu0 0
        %960 = vmatmul.mubr.bf16.gmra.mrb[0].mxu0 %v687
        %v961 = vpop.f32.mrb[0].mxu0
        %v962 = vadd.f32 0.0, %v961
        %v963 = vpop.f32.mrb[0].mxu0
        %v964 = vpop.f32.mrb[0].mxu0
        %v965 = vadd.f32 0.0, %v964
        %v966 = vpop.f32.mrb[0].mxu0
        %967 = vmatprep.mubr.bf16.mxu0 0
        %968 = vmatmul.mubr.bf16.gmra.mrb[0].mxu0 %v690
        %v969 = vpop.f32.mrb[0].mxu0
        %v970 = vadd.f32 0.0, %v969
        %v971 = vpop.f32.mrb[0].mxu0
        %v972 = vpop.f32.mrb[0].mxu0
        %v973 = vadd.f32 0.0, %v972
        %v974 = vpop.f32.mrb[0].mxu0
        %975 = vmatprep.mubr.bf16.mxu0 0
        %976 = vmatmul.mubr.bf16.gmra.mrb[0].mxu0 %v693
        %v977 = vpop.f32.mrb[0].mxu0
        %v978 = vadd.f32 0.0, %v977
        %v979 = vpop.f32.mrb[0].mxu0
        %v980 = vpop.f32.mrb[0].mxu0
        %v981 = vadd.f32 0.0, %v980
        %v982 = vpop.f32.mrb[0].mxu0
        %983 = vmatprep.mubr.bf16.mxu0 0
        %984 = vmatmul.mubr.bf16.gmra.mrb[0].mxu0 %v696
        %v985 = vpop.f32.mrb[0].mxu0
        %v986 = vadd.f32 0.0, %v985
        %v987 = vpop.f32.mrb[0].mxu0
        %v988 = vpop.f32.mrb[0].mxu0
        %v989 = vadd.f32 0.0, %v988
        %v990 = vpop.f32.mrb[0].mxu0
        %991 = vmatprep.mubr.bf16.mxu0 0
        %992 = vmatmul.mubr.bf16.gmra.mrb[0].mxu0 %v699
        %v993 = vpop.f32.mrb[0].mxu0
        %v994 = vadd.f32 0.0, %v993
        %v995 = vpop.f32.mrb[0].mxu0
        %v996 = vpop.f32.mrb[0].mxu0
        %v997 = vadd.f32 0.0, %v996
        %v998 = vpop.f32.mrb[0].mxu0
        %999 = vmatprep.mubr.bf16.mxu0 0
        %1000 = vmatmul.mubr.bf16.gmra.mrb[0].mxu0 %v906
        %v1001 = vpop.f32.mrb[0].mxu0
        %v1002 = vadd.f32 0.0, %v1001
        %v1003 = vpop.f32.mrb[0].mxu0
        %v1004 = vpop.f32.mrb[0].mxu0
        %v1005 = vadd.f32 0.0, %v1004
        %v1006 = vpop.f32.mrb[0].mxu0
        %1007 = vdwg.mxu0
        %v1008 = vadd.f32 %v843, %v946
        %v1009 = vadd.f32 %v846, %v949
        %v1010 = vadd.f32 %v851, %v954
        %v1011 = vadd.f32 %v854, %v957
        %v1012 = vadd.f32 %v859, %v962
        %v1013 = vadd.f32 %v862, %v965
        %v1014 = vadd.f32 %v867, %v970
        %v1015 = vadd.f32 %v870, %v973
        %v1016 = vadd.f32 %v875, %v978
        %v1017 = vadd.f32 %v878, %v981
        %v1018 = vadd.f32 %v883, %v986
        %v1019 = vadd.f32 %v886, %v989
        %v1020 = vadd.f32 %v891, %v994
        %v1021 = vadd.f32 %v894, %v997
        %v1022 = vadd.f32 %v899, %v1002
        %v1023 = vadd.f32 %v902, %v1005
        %v1024 = vpack.c.bf16 %v508, %v507
        %v1025 = vpack.c.bf16 %v472, %v471
        %v1026 = vpack.c.bf16 %v474, %v473
        %v1027 = vpack.c.bf16 %v476, %v475
        %v1028 = vpack.c.bf16 %v478, %v477
        %v1029 = vpack.c.bf16 %v480, %v479
        %v1030 = vpack.c.bf16 %v482, %v481
        %v1031 = vpack.c.bf16 %v484, %v483
        %v1032 = vpack.c.bf16 %v486, %v485
        %v1033 = vpack.c.bf16 %v514, %v513
        %v1035 = vsel %vm676, %v1024, 0
        %v1038 = vsel %vm676, %v1025, 0
        %v1041 = vsel %vm676, %v1026, 0
        %v1044 = vsel %vm676, %v1027, 0
        %v1047 = vsel %vm676, %v1028, 0
        %v1050 = vsel %vm676, %v1029, 0
        %v1053 = vsel %vm676, %v1030, 0
        %v1056 = vsel %vm676, %v1031, 0
        %v1059 = vsel %vm701, %v658, 0
        %1061 = vmatprep.subr.bf16.mxu0 0
        %1062 = vmatpush1.bf16.msra.mxu0 %v1059
        %1063 = vmatprep.subr.bf16.mxu0 0
        %1064 = vmatpush1.bf16.msra.mxu0 0
        %1065 = vmatprep.subr.bf16.mxu0 0
        %1066 = vmatpush1.bf16.msra.mxu0 0
        %1067 = vmatprep.subr.bf16.mxu0 0
        %1068 = vmatpush1.bf16.msra.mxu0 0
        %1069 = vmatprep.subr.bf16.mxu0 0
        %1070 = vmatpush1.bf16.msra.mxu0 0
        %1071 = vmatprep.subr.bf16.mxu0 0
        %1072 = vmatpush1.bf16.msra.mxu0 0
        %1073 = vmatprep.subr.bf16.mxu0 0
        %1074 = vmatpush1.bf16.msra.mxu0 0
        %1075 = vmatprep.subr.bf16.mxu0 0
        %1076 = vmatpush1.bf16.msra.mxu0 0
        %1077 = vmatprep.subr.bf16.mxu0 0
        %1078 = vmatpush1.bf16.msra.mxu0 0
        %1079 = vmatprep.subr.bf16.mxu0 0
        %1080 = vmatpush1.bf16.msra.mxu0 0
        %1081 = vmatprep.subr.bf16.mxu0 0
        %1082 = vmatpush1.bf16.msra.mxu0 0
        %1083 = vmatprep.subr.bf16.mxu0 0
        %1084 = vmatpush1.bf16.msra.mxu0 0
        %1085 = vmatprep.subr.bf16.mxu0 0
        %1086 = vmatpush1.bf16.msra.mxu0 0
        %1087 = vmatprep.subr.bf16.mxu0 0
        %1088 = vmatpush1.bf16.msra.mxu0 0
        %1089 = vmatprep.subr.bf16.mxu0 0
        %1090 = vmatpush1.bf16.msra.mxu0 0
        %1091 = vmatprep.subr.bf16.mxu0 0
        %1092 = vmatpush1.bf16.msra.mxu0 0
        %1093 = vmatprep.mubr.bf16.mxu0 0
        %1094 = vmatmul.mubr.bf16.gmra.mrb[0].mxu0 %v1035
        %v1095 = vpop.f32.mrb[0].mxu0
        %v1096 = vadd.f32 0.0, %v1095
        %v1097 = vpop.f32.mrb[0].mxu0
        %v1098 = vpop.f32.mrb[0].mxu0
        %v1099 = vadd.f32 0.0, %v1098
        %v1100 = vpop.f32.mrb[0].mxu0
        %1101 = vmatprep.mubr.bf16.mxu0 0
        %1102 = vmatmul.mubr.bf16.gmra.mrb[0].mxu0 %v1038
        %v1103 = vpop.f32.mrb[0].mxu0
        %v1104 = vadd.f32 0.0, %v1103
        %v1105 = vpop.f32.mrb[0].mxu0
        %v1106 = vpop.f32.mrb[0].mxu0
        %v1107 = vadd.f32 0.0, %v1106
        %v1108 = vpop.f32.mrb[0].mxu0
        %1109 = vmatprep.mubr.bf16.mxu0 0
        %1110 = vmatmul.mubr.bf16.gmra.mrb[0].mxu0 %v1041
        %v1111 = vpop.f32.mrb[0].mxu0
        %v1112 = vadd.f32 0.0, %v1111
        %v1113 = vpop.f32.mrb[0].mxu0
        %v1114 = vpop.f32.mrb[0].mxu0
        %v1115 = vadd.f32 0.0, %v1114
        %v1116 = vpop.f32.mrb[0].mxu0
        %1117 = vmatprep.mubr.bf16.mxu0 0
        %1118 = vmatmul.mubr.bf16.gmra.mrb[0].mxu0 %v1044
        %v1119 = vpop.f32.mrb[0].mxu0
        %v1120 = vadd.f32 0.0, %v1119
        %v1121 = vpop.f32.mrb[0].mxu0
        %v1122 = vpop.f32.mrb[0].mxu0
        %v1123 = vadd.f32 0.0, %v1122
        %v1124 = vpop.f32.mrb[0].mxu0
        %1125 = vmatprep.mubr.bf16.mxu0 0
        %1126 = vmatmul.mubr.bf16.gmra.mrb[0].mxu0 %v1047
        %v1127 = vpop.f32.mrb[0].mxu0
        %v1128 = vadd.f32 0.0, %v1127
        %v1129 = vpop.f32.mrb[0].mxu0
        %v1130 = vpop.f32.mrb[0].mxu0
        %v1131 = vadd.f32 0.0, %v1130
        %v1132 = vpop.f32.mrb[0].mxu0
        %1133 = vmatprep.mubr.bf16.mxu0 0
        %1134 = vmatmul.mubr.bf16.gmra.mrb[0].mxu0 %v1050
        %v1135 = vpop.f32.mrb[0].mxu0
        %v1136 = vadd.f32 0.0, %v1135
        %v1137 = vpop.f32.mrb[0].mxu0
        %v1138 = vpop.f32.mrb[0].mxu0
        %v1139 = vadd.f32 0.0, %v1138
        %v1140 = vpop.f32.mrb[0].mxu0
        %1141 = vmatprep.mubr.bf16.mxu0 0
        %1142 = vmatmul.mubr.bf16.gmra.mrb[0].mxu0 %v1053
        %v1143 = vpop.f32.mrb[0].mxu0
        %v1144 = vadd.f32 0.0, %v1143
        %v1145 = vpop.f32.mrb[0].mxu0
        %v1146 = vpop.f32.mrb[0].mxu0
        %v1147 = vadd.f32 0.0, %v1146
        %v1148 = vpop.f32.mrb[0].mxu0
        %1149 = vmatprep.mubr.bf16.mxu0 0
        %1150 = vmatmul.mubr.bf16.gmra.mrb[0].mxu0 %v1056
        %v1151 = vpop.f32.mrb[0].mxu0
        %v1152 = vadd.f32 0.0, %v1151
        %v1153 = vpop.f32.mrb[0].mxu0
        %v1154 = vpop.f32.mrb[0].mxu0
        %v1155 = vadd.f32 0.0, %v1154
        %v1156 = vpop.f32.mrb[0].mxu0
        %1157 = vdwg.mxu0
        %v1158 = vadd.f32 %v1008, %v1096
        %v1159 = vadd.f32 %v1009, %v1099
        %v1160 = vadd.f32 %v1010, %v1104
        %v1161 = vadd.f32 %v1011, %v1107
        %v1162 = vadd.f32 %v1012, %v1112
        %v1163 = vadd.f32 %v1013, %v1115
        %v1164 = vadd.f32 %v1014, %v1120
        %v1165 = vadd.f32 %v1015, %v1123
        %v1166 = vadd.f32 %v1016, %v1128
        %v1167 = vadd.f32 %v1017, %v1131
        %v1168 = vadd.f32 %v1018, %v1136
        %v1169 = vadd.f32 %v1019, %v1139
        %v1170 = vadd.f32 %v1020, %v1144
        %v1171 = vadd.f32 %v1021, %v1147
        %v1172 = vadd.f32 %v1022, %v1152
        %v1173 = vadd.f32 %v1023, %v1155
        %v1175 = vsel %vm676, %v1032, 0
        %v1178 = vsel %vm701, %v661, 0
        %1180 = vmatprep.subr.bf16.mxu0 0
        %1181 = vmatpush1.bf16.msra.mxu0 %v1178
        %1182 = vmatprep.subr.bf16.mxu0 0
        %1183 = vmatpush1.bf16.msra.mxu0 0
        %1184 = vmatprep.subr.bf16.mxu0 0
        %1185 = vmatpush1.bf16.msra.mxu0 0
        %1186 = vmatprep.subr.bf16.mxu0 0
        %1187 = vmatpush1.bf16.msra.mxu0 0
        %1188 = vmatprep.subr.bf16.mxu0 0
        %1189 = vmatpush1.bf16.msra.mxu0 0
        %1190 = vmatprep.subr.bf16.mxu0 0
        %1191 = vmatpush1.bf16.msra.mxu0 0
        %1192 = vmatprep.subr.bf16.mxu0 0
        %1193 = vmatpush1.bf16.msra.mxu0 0
        %1194 = vmatprep.subr.bf16.mxu0 0
        %1195 = vmatpush1.bf16.msra.mxu0 0
        %1196 = vmatprep.subr.bf16.mxu0 0
        %1197 = vmatpush1.bf16.msra.mxu0 0
        %1198 = vmatprep.subr.bf16.mxu0 0
        %1199 = vmatpush1.bf16.msra.mxu0 0
        %1200 = vmatprep.subr.bf16.mxu0 0
        %1201 = vmatpush1.bf16.msra.mxu0 0
        %1202 = vmatprep.subr.bf16.mxu0 0
        %1203 = vmatpush1.bf16.msra.mxu0 0
        %1204 = vmatprep.subr.bf16.mxu0 0
        %1205 = vmatpush1.bf16.msra.mxu0 0
        %1206 = vmatprep.subr.bf16.mxu0 0
        %1207 = vmatpush1.bf16.msra.mxu0 0
        %1208 = vmatprep.subr.bf16.mxu0 0
        %1209 = vmatpush1.bf16.msra.mxu0 0
        %1210 = vmatprep.subr.bf16.mxu0 0
        %1211 = vmatpush1.bf16.msra.mxu0 0
        %1212 = vmatprep.mubr.bf16.mxu0 0
        %1213 = vmatmul.mubr.bf16.gmra.mrb[0].mxu0 %v1038
        %v1214 = vpop.f32.mrb[0].mxu0
        %v1215 = vadd.f32 0.0, %v1214
        %v1216 = vpop.f32.mrb[0].mxu0
        %v1217 = vpop.f32.mrb[0].mxu0
        %v1218 = vadd.f32 0.0, %v1217
        %v1219 = vpop.f32.mrb[0].mxu0
        %1220 = vmatprep.mubr.bf16.mxu0 0
        %1221 = vmatmul.mubr.bf16.gmra.mrb[0].mxu0 %v1041
        %v1222 = vpop.f32.mrb[0].mxu0
        %v1223 = vadd.f32 0.0, %v1222
        %v1224 = vpop.f32.mrb[0].mxu0
        %v1225 = vpop.f32.mrb[0].mxu0
        %v1226 = vadd.f32 0.0, %v1225
        %v1227 = vpop.f32.mrb[0].mxu0
        %1228 = vmatprep.mubr.bf16.mxu0 0
        %1229 = vmatmul.mubr.bf16.gmra.mrb[0].mxu0 %v1044
        %v1230 = vpop.f32.mrb[0].mxu0
        %v1231 = vadd.f32 0.0, %v1230
        %v1232 = vpop.f32.mrb[0].mxu0
        %v1233 = vpop.f32.mrb[0].mxu0
        %v1234 = vadd.f32 0.0, %v1233
        %v1235 = vpop.f32.mrb[0].mxu0
        %1236 = vmatprep.mubr.bf16.mxu0 0
        %1237 = vmatmul.mubr.bf16.gmra.mrb[0].mxu0 %v1047
        %v1238 = vpop.f32.mrb[0].mxu0
        %v1239 = vadd.f32 0.0, %v1238
        %v1240 = vpop.f32.mrb[0].mxu0
        %v1241 = vpop.f32.mrb[0].mxu0
        %v1242 = vadd.f32 0.0, %v1241
        %v1243 = vpop.f32.mrb[0].mxu0
        %1244 = vmatprep.mubr.bf16.mxu0 0
        %1245 = vmatmul.mubr.bf16.gmra.mrb[0].mxu0 %v1050
        %v1246 = vpop.f32.mrb[0].mxu0
        %v1247 = vadd.f32 0.0, %v1246
        %v1248 = vpop.f32.mrb[0].mxu0
        %v1249 = vpop.f32.mrb[0].mxu0
        %v1250 = vadd.f32 0.0, %v1249
        %v1251 = vpop.f32.mrb[0].mxu0
        %1252 = vmatprep.mubr.bf16.mxu0 0
        %1253 = vmatmul.mubr.bf16.gmra.mrb[0].mxu0 %v1053
        %v1254 = vpop.f32.mrb[0].mxu0
        %v1255 = vadd.f32 0.0, %v1254
        %v1256 = vpop.f32.mrb[0].mxu0
        %v1257 = vpop.f32.mrb[0].mxu0
        %v1258 = vadd.f32 0.0, %v1257
        %v1259 = vpop.f32.mrb[0].mxu0
        %1260 = vmatprep.mubr.bf16.mxu0 0
        %1261 = vmatmul.mubr.bf16.gmra.mrb[0].mxu0 %v1056
        %v1262 = vpop.f32.mrb[0].mxu0
        %v1263 = vadd.f32 0.0, %v1262
        %v1264 = vpop.f32.mrb[0].mxu0
        %v1265 = vpop.f32.mrb[0].mxu0
        %v1266 = vadd.f32 0.0, %v1265
        %v1267 = vpop.f32.mrb[0].mxu0
        %1268 = vmatprep.mubr.bf16.mxu0 0
        %1269 = vmatmul.mubr.bf16.gmra.mrb[0].mxu0 %v1175
        %v1270 = vpop.f32.mrb[0].mxu0
        %v1271 = vadd.f32 0.0, %v1270
        %v1272 = vpop.f32.mrb[0].mxu0
        %v1273 = vpop.f32.mrb[0].mxu0
        %v1274 = vadd.f32 0.0, %v1273
        %v1275 = vpop.f32.mrb[0].mxu0
        %1276 = vdwg.mxu0
        %v1277 = vadd.f32 %v1158, %v1215
        %v1278 = vadd.f32 %v1159, %v1218
        %v1279 = vadd.f32 %v1160, %v1223
        %v1280 = vadd.f32 %v1161, %v1226
        %v1281 = vadd.f32 %v1162, %v1231
        %v1282 = vadd.f32 %v1163, %v1234
        %v1283 = vadd.f32 %v1164, %v1239
        %v1284 = vadd.f32 %v1165, %v1242
        %v1285 = vadd.f32 %v1166, %v1247
        %v1286 = vadd.f32 %v1167, %v1250
        %v1287 = vadd.f32 %v1168, %v1255
        %v1288 = vadd.f32 %v1169, %v1258
        %v1289 = vadd.f32 %v1170, %v1263
        %v1290 = vadd.f32 %v1171, %v1266
        %v1291 = vadd.f32 %v1172, %v1271
        %v1292 = vadd.f32 %v1173, %v1274
        %v1294 = vsel %vm676, %v1033, 0
        %v1297 = vsel %vm701, %v664, 0
        %1299 = vmatprep.subr.bf16.mxu0 0
        %1300 = vmatpush1.bf16.msra.mxu0 %v1297
        %1301 = vmatprep.subr.bf16.mxu0 0
        %1302 = vmatpush1.bf16.msra.mxu0 0
        %1303 = vmatprep.subr.bf16.mxu0 0
        %1304 = vmatpush1.bf16.msra.mxu0 0
        %1305 = vmatprep.subr.bf16.mxu0 0
        %1306 = vmatpush1.bf16.msra.mxu0 0
        %1307 = vmatprep.subr.bf16.mxu0 0
        %1308 = vmatpush1.bf16.msra.mxu0 0
        %1309 = vmatprep.subr.bf16.mxu0 0
        %1310 = vmatpush1.bf16.msra.mxu0 0
        %1311 = vmatprep.subr.bf16.mxu0 0
        %1312 = vmatpush1.bf16.msra.mxu0 0
        %1313 = vmatprep.subr.bf16.mxu0 0
        %1314 = vmatpush1.bf16.msra.mxu0 0
        %1315 = vmatprep.subr.bf16.mxu0 0
        %1316 = vmatpush1.bf16.msra.mxu0 0
        %1317 = vmatprep.subr.bf16.mxu0 0
        %1318 = vmatpush1.bf16.msra.mxu0 0
        %1319 = vmatprep.subr.bf16.mxu0 0
        %1320 = vmatpush1.bf16.msra.mxu0 0
        %1321 = vmatprep.subr.bf16.mxu0 0
        %1322 = vmatpush1.bf16.msra.mxu0 0
        %1323 = vmatprep.subr.bf16.mxu0 0
        %1324 = vmatpush1.bf16.msra.mxu0 0
        %1325 = vmatprep.subr.bf16.mxu0 0
        %1326 = vmatpush1.bf16.msra.mxu0 0
        %1327 = vmatprep.subr.bf16.mxu0 0
        %1328 = vmatpush1.bf16.msra.mxu0 0
        %1329 = vmatprep.subr.bf16.mxu0 0
        %1330 = vmatpush1.bf16.msra.mxu0 0
        %1331 = vmatprep.mubr.bf16.mxu0 0
        %1332 = vmatmul.mubr.bf16.gmra.mrb[0].mxu0 %v1041
        %v1333 = vpop.f32.mrb[0].mxu0
        %v1334 = vadd.f32 0.0, %v1333
        %v1335 = vpop.f32.mrb[0].mxu0
        %v1336 = vpop.f32.mrb[0].mxu0
        %v1337 = vadd.f32 0.0, %v1336
        %v1338 = vpop.f32.mrb[0].mxu0
        %1339 = vmatprep.mubr.bf16.mxu0 0
        %1340 = vmatmul.mubr.bf16.gmra.mrb[0].mxu0 %v1044
        %v1341 = vpop.f32.mrb[0].mxu0
        %v1342 = vadd.f32 0.0, %v1341
        %v1343 = vpop.f32.mrb[0].mxu0
        %v1344 = vpop.f32.mrb[0].mxu0
        %v1345 = vadd.f32 0.0, %v1344
        %v1346 = vpop.f32.mrb[0].mxu0
        %1347 = vmatprep.mubr.bf16.mxu0 0
        %1348 = vmatmul.mubr.bf16.gmra.mrb[0].mxu0 %v1047
        %v1349 = vpop.f32.mrb[0].mxu0
        %v1350 = vadd.f32 0.0, %v1349
        %v1351 = vpop.f32.mrb[0].mxu0
        %v1352 = vpop.f32.mrb[0].mxu0
        %v1353 = vadd.f32 0.0, %v1352
        %v1354 = vpop.f32.mrb[0].mxu0
        %1355 = vmatprep.mubr.bf16.mxu0 0
        %1356 = vmatmul.mubr.bf16.gmra.mrb[0].mxu0 %v1050
        %v1357 = vpop.f32.mrb[0].mxu0
        %v1358 = vadd.f32 0.0, %v1357
        %v1359 = vpop.f32.mrb[0].mxu0
        %v1360 = vpop.f32.mrb[0].mxu0
        %v1361 = vadd.f32 0.0, %v1360
        %v1362 = vpop.f32.mrb[0].mxu0
        %1363 = vmatprep.mubr.bf16.mxu0 0
        %1364 = vmatmul.mubr.bf16.gmra.mrb[0].mxu0 %v1053
        %v1365 = vpop.f32.mrb[0].mxu0
        %v1366 = vadd.f32 0.0, %v1365
        %v1367 = vpop.f32.mrb[0].mxu0
        %v1368 = vpop.f32.mrb[0].mxu0
        %v1369 = vadd.f32 0.0, %v1368
        %v1370 = vpop.f32.mrb[0].mxu0
        %1371 = vmatprep.mubr.bf16.mxu0 0
        %1372 = vmatmul.mubr.bf16.gmra.mrb[0].mxu0 %v1056
        %v1373 = vpop.f32.mrb[0].mxu0
        %v1374 = vadd.f32 0.0, %v1373
        %v1375 = vpop.f32.mrb[0].mxu0
        %v1376 = vpop.f32.mrb[0].mxu0
        %v1377 = vadd.f32 0.0, %v1376
        %v1378 = vpop.f32.mrb[0].mxu0
        %1379 = vmatprep.mubr.bf16.mxu0 0
        %1380 = vmatmul.mubr.bf16.gmra.mrb[0].mxu0 %v1175
        %v1381 = vpop.f32.mrb[0].mxu0
        %v1382 = vadd.f32 0.0, %v1381
        %v1383 = vpop.f32.mrb[0].mxu0
        %v1384 = vpop.f32.mrb[0].mxu0
        %v1385 = vadd.f32 0.0, %v1384
        %v1386 = vpop.f32.mrb[0].mxu0
        %1387 = vmatprep.mubr.bf16.mxu0 0
        %1388 = vmatmul.mubr.bf16.gmra.mrb[0].mxu0 %v1294
        %v1389 = vpop.f32.mrb[0].mxu0
        %v1390 = vadd.f32 0.0, %v1389
        %v1391 = vpop.f32.mrb[0].mxu0
        %v1392 = vpop.f32.mrb[0].mxu0
        %v1393 = vadd.f32 0.0, %v1392
        %v1394 = vpop.f32.mrb[0].mxu0
        %1395 = vdwg.mxu0
        %v1396 = vadd.f32 %v1277, %v1334
        %v1397 = vadd.f32 %v1278, %v1337
        %v1398 = vadd.f32 %v1279, %v1342
        %v1399 = vadd.f32 %v1280, %v1345
        %v1400 = vadd.f32 %v1281, %v1350
        %v1401 = vadd.f32 %v1282, %v1353
        %v1402 = vadd.f32 %v1283, %v1358
        %v1403 = vadd.f32 %v1284, %v1361
        %v1404 = vadd.f32 %v1285, %v1366
        %v1405 = vadd.f32 %v1286, %v1369
        %v1406 = vadd.f32 %v1287, %v1374
        %v1407 = vadd.f32 %v1288, %v1377
        %v1408 = vadd.f32 %v1289, %v1382
        %v1409 = vadd.f32 %v1290, %v1385
        %v1410 = vadd.f32 %v1291, %v1390
        %v1411 = vadd.f32 %v1292, %v1393
        %v1412 = vpack.c.bf16 %v647, %v599
        %v1413 = vpack.c.bf16 %v648, %v602
        %v1414 = vpack.c.bf16 %v649, %v605
        %v1415 = vpack.c.bf16 %v650, %v608
        %v1416 = vpack.c.bf16 %v651, %v611
        %v1417 = vpack.c.bf16 %v652, %v614
        %v1418 = vpack.c.bf16 %v653, %v617
        %v1419 = vpack.c.bf16 %v654, %v620
        %v1420 = vpack.c.bf16 %v655, %v623
        %v1421 = vpack.c.bf16 %v656, %v626
        %v1423 = vsel %vm676, %v1412, 0
        %v1426 = vsel %vm676, %v1413, 0
        %v1429 = vsel %vm676, %v1414, 0
        %v1432 = vsel %vm676, %v1415, 0
        %v1435 = vsel %vm676, %v1416, 0
        %v1438 = vsel %vm676, %v1417, 0
        %v1441 = vsel %vm676, %v1418, 0
        %v1444 = vsel %vm676, %v1419, 0
        %v1447 = vsel %vm701, %v659, 0
        %1449 = vmatprep.subr.bf16.mxu0 0
        %1450 = vmatpush1.bf16.msra.mxu0 %v1447
        %1451 = vmatprep.subr.bf16.mxu0 0
        %1452 = vmatpush1.bf16.msra.mxu0 0
        %1453 = vmatprep.subr.bf16.mxu0 0
        %1454 = vmatpush1.bf16.msra.mxu0 0
        %1455 = vmatprep.subr.bf16.mxu0 0
        %1456 = vmatpush1.bf16.msra.mxu0 0
        %1457 = vmatprep.subr.bf16.mxu0 0
        %1458 = vmatpush1.bf16.msra.mxu0 0
        %1459 = vmatprep.subr.bf16.mxu0 0
        %1460 = vmatpush1.bf16.msra.mxu0 0
        %1461 = vmatprep.subr.bf16.mxu0 0
        %1462 = vmatpush1.bf16.msra.mxu0 0
        %1463 = vmatprep.subr.bf16.mxu0 0
        %1464 = vmatpush1.bf16.msra.mxu0 0
        %1465 = vmatprep.subr.bf16.mxu0 0
        %1466 = vmatpush1.bf16.msra.mxu0 0
        %1467 = vmatprep.subr.bf16.mxu0 0
        %1468 = vmatpush1.bf16.msra.mxu0 0
        %1469 = vmatprep.subr.bf16.mxu0 0
        %1470 = vmatpush1.bf16.msra.mxu0 0
        %1471 = vmatprep.subr.bf16.mxu0 0
        %1472 = vmatpush1.bf16.msra.mxu0 0
        %1473 = vmatprep.subr.bf16.mxu0 0
        %1474 = vmatpush1.bf16.msra.mxu0 0
        %1475 = vmatprep.subr.bf16.mxu0 0
        %1476 = vmatpush1.bf16.msra.mxu0 0
        %1477 = vmatprep.subr.bf16.mxu0 0
        %1478 = vmatpush1.bf16.msra.mxu0 0
        %1479 = vmatprep.subr.bf16.mxu0 0
        %1480 = vmatpush1.bf16.msra.mxu0 0
        %1481 = vmatprep.mubr.bf16.mxu0 0
        %1482 = vmatmul.mubr.bf16.gmra.mrb[0].mxu0 %v1423
        %v1483 = vpop.f32.mrb[0].mxu0
        %v1484 = vadd.f32 0.0, %v1483
        %v1485 = vpop.f32.mrb[0].mxu0
        %v1486 = vpop.f32.mrb[0].mxu0
        %v1487 = vadd.f32 0.0, %v1486
        %v1488 = vpop.f32.mrb[0].mxu0
        %1489 = vmatprep.mubr.bf16.mxu0 0
        %1490 = vmatmul.mubr.bf16.gmra.mrb[0].mxu0 %v1426
        %v1491 = vpop.f32.mrb[0].mxu0
        %v1492 = vadd.f32 0.0, %v1491
        %v1493 = vpop.f32.mrb[0].mxu0
        %v1494 = vpop.f32.mrb[0].mxu0
        %v1495 = vadd.f32 0.0, %v1494
        %v1496 = vpop.f32.mrb[0].mxu0
        %1497 = vmatprep.mubr.bf16.mxu0 0
        %1498 = vmatmul.mubr.bf16.gmra.mrb[0].mxu0 %v1429
        %v1499 = vpop.f32.mrb[0].mxu0
        %v1500 = vadd.f32 0.0, %v1499
        %v1501 = vpop.f32.mrb[0].mxu0
        %v1502 = vpop.f32.mrb[0].mxu0
        %v1503 = vadd.f32 0.0, %v1502
        %v1504 = vpop.f32.mrb[0].mxu0
        %1505 = vmatprep.mubr.bf16.mxu0 0
        %1506 = vmatmul.mubr.bf16.gmra.mrb[0].mxu0 %v1432
        %v1507 = vpop.f32.mrb[0].mxu0
        %v1508 = vadd.f32 0.0, %v1507
        %v1509 = vpop.f32.mrb[0].mxu0
        %v1510 = vpop.f32.mrb[0].mxu0
        %v1511 = vadd.f32 0.0, %v1510
        %v1512 = vpop.f32.mrb[0].mxu0
        %1513 = vmatprep.mubr.bf16.mxu0 0
        %1514 = vmatmul.mubr.bf16.gmra.mrb[0].mxu0 %v1435
        %v1515 = vpop.f32.mrb[0].mxu0
        %v1516 = vadd.f32 0.0, %v1515
        %v1517 = vpop.f32.mrb[0].mxu0
        %v1518 = vpop.f32.mrb[0].mxu0
        %v1519 = vadd.f32 0.0, %v1518
        %v1520 = vpop.f32.mrb[0].mxu0
        %1521 = vmatprep.mubr.bf16.mxu0 0
        %1522 = vmatmul.mubr.bf16.gmra.mrb[0].mxu0 %v1438
        %v1523 = vpop.f32.mrb[0].mxu0
        %v1524 = vadd.f32 0.0, %v1523
        %v1525 = vpop.f32.mrb[0].mxu0
        %v1526 = vpop.f32.mrb[0].mxu0
        %v1527 = vadd.f32 0.0, %v1526
        %v1528 = vpop.f32.mrb[0].mxu0
        %1529 = vmatprep.mubr.bf16.mxu0 0
        %1530 = vmatmul.mubr.bf16.gmra.mrb[0].mxu0 %v1441
        %v1531 = vpop.f32.mrb[0].mxu0
        %v1532 = vadd.f32 0.0, %v1531
        %v1533 = vpop.f32.mrb[0].mxu0
        %v1534 = vpop.f32.mrb[0].mxu0
        %v1535 = vadd.f32 0.0, %v1534
        %v1536 = vpop.f32.mrb[0].mxu0
        %1537 = vmatprep.mubr.bf16.mxu0 0
        %1538 = vmatmul.mubr.bf16.gmra.mrb[0].mxu0 %v1444
        %v1539 = vpop.f32.mrb[0].mxu0
        %v1540 = vadd.f32 0.0, %v1539
        %v1541 = vpop.f32.mrb[0].mxu0
        %v1542 = vpop.f32.mrb[0].mxu0
        %v1543 = vadd.f32 0.0, %v1542
        %v1544 = vpop.f32.mrb[0].mxu0
        %1545 = vdwg.mxu0
        %v1546 = vadd.f32 %v1396, %v1484
        %v1547 = vadd.f32 %v1397, %v1487
        %v1548 = vadd.f32 %v1398, %v1492
        %v1549 = vadd.f32 %v1399, %v1495
        %v1550 = vadd.f32 %v1400, %v1500
        %v1551 = vadd.f32 %v1401, %v1503
        %v1552 = vadd.f32 %v1402, %v1508
        %v1553 = vadd.f32 %v1403, %v1511
        %v1554 = vadd.f32 %v1404, %v1516
        %v1555 = vadd.f32 %v1405, %v1519
        %v1556 = vadd.f32 %v1406, %v1524
        %v1557 = vadd.f32 %v1407, %v1527
        %v1558 = vadd.f32 %v1408, %v1532
        %v1559 = vadd.f32 %v1409, %v1535
        %v1560 = vadd.f32 %v1410, %v1540
        %v1561 = vadd.f32 %v1411, %v1543
        %v1563 = vsel %vm676, %v1420, 0
        %v1566 = vsel %vm701, %v662, 0
        %1568 = vmatprep.subr.bf16.mxu0 0
        %1569 = vmatpush1.bf16.msra.mxu0 %v1566
        %1570 = vmatprep.subr.bf16.mxu0 0
        %1571 = vmatpush1.bf16.msra.mxu0 0
        %1572 = vmatprep.subr.bf16.mxu0 0
        %1573 = vmatpush1.bf16.msra.mxu0 0
        %1574 = vmatprep.subr.bf16.mxu0 0
        %1575 = vmatpush1.bf16.msra.mxu0 0
        %1576 = vmatprep.subr.bf16.mxu0 0
        %1577 = vmatpush1.bf16.msra.mxu0 0
        %1578 = vmatprep.subr.bf16.mxu0 0
        %1579 = vmatpush1.bf16.msra.mxu0 0
        %1580 = vmatprep.subr.bf16.mxu0 0
        %1581 = vmatpush1.bf16.msra.mxu0 0
        %1582 = vmatprep.subr.bf16.mxu0 0
        %1583 = vmatpush1.bf16.msra.mxu0 0
        %1584 = vmatprep.subr.bf16.mxu0 0
        %1585 = vmatpush1.bf16.msra.mxu0 0
        %1586 = vmatprep.subr.bf16.mxu0 0
        %1587 = vmatpush1.bf16.msra.mxu0 0
        %1588 = vmatprep.subr.bf16.mxu0 0
        %1589 = vmatpush1.bf16.msra.mxu0 0
        %1590 = vmatprep.subr.bf16.mxu0 0
        %1591 = vmatpush1.bf16.msra.mxu0 0
        %1592 = vmatprep.subr.bf16.mxu0 0
        %1593 = vmatpush1.bf16.msra.mxu0 0
        %1594 = vmatprep.subr.bf16.mxu0 0
        %1595 = vmatpush1.bf16.msra.mxu0 0
        %1596 = vmatprep.subr.bf16.mxu0 0
        %1597 = vmatpush1.bf16.msra.mxu0 0
        %1598 = vmatprep.subr.bf16.mxu0 0
        %1599 = vmatpush1.bf16.msra.mxu0 0
        %1600 = vmatprep.mubr.bf16.mxu0 0
        %1601 = vmatmul.mubr.bf16.gmra.mrb[0].mxu0 %v1426
        %v1602 = vpop.f32.mrb[0].mxu0
        %v1603 = vadd.f32 0.0, %v1602
        %v1604 = vpop.f32.mrb[0].mxu0
        %v1605 = vpop.f32.mrb[0].mxu0
        %v1606 = vadd.f32 0.0, %v1605
        %v1607 = vpop.f32.mrb[0].mxu0
        %1608 = vmatprep.mubr.bf16.mxu0 0
        %1609 = vmatmul.mubr.bf16.gmra.mrb[0].mxu0 %v1429
        %v1610 = vpop.f32.mrb[0].mxu0
        %v1611 = vadd.f32 0.0, %v1610
        %v1612 = vpop.f32.mrb[0].mxu0
        %v1613 = vpop.f32.mrb[0].mxu0
        %v1614 = vadd.f32 0.0, %v1613
        %v1615 = vpop.f32.mrb[0].mxu0
        %1616 = vmatprep.mubr.bf16.mxu0 0
        %1617 = vmatmul.mubr.bf16.gmra.mrb[0].mxu0 %v1432
        %v1618 = vpop.f32.mrb[0].mxu0
        %v1619 = vadd.f32 0.0, %v1618
        %v1620 = vpop.f32.mrb[0].mxu0
        %v1621 = vpop.f32.mrb[0].mxu0
        %v1622 = vadd.f32 0.0, %v1621
        %v1623 = vpop.f32.mrb[0].mxu0
        %1624 = vmatprep.mubr.bf16.mxu0 0
        %1625 = vmatmul.mubr.bf16.gmra.mrb[0].mxu0 %v1435
        %v1626 = vpop.f32.mrb[0].mxu0
        %v1627 = vadd.f32 0.0, %v1626
        %v1628 = vpop.f32.mrb[0].mxu0
        %v1629 = vpop.f32.mrb[0].mxu0
        %v1630 = vadd.f32 0.0, %v1629
        %v1631 = vpop.f32.mrb[0].mxu0
        %1632 = vmatprep.mubr.bf16.mxu0 0
        %1633 = vmatmul.mubr.bf16.gmra.mrb[0].mxu0 %v1438
        %v1634 = vpop.f32.mrb[0].mxu0
        %v1635 = vadd.f32 0.0, %v1634
        %v1636 = vpop.f32.mrb[0].mxu0
        %v1637 = vpop.f32.mrb[0].mxu0
        %v1638 = vadd.f32 0.0, %v1637
        %v1639 = vpop.f32.mrb[0].mxu0
        %1640 = vmatprep.mubr.bf16.mxu0 0
        %1641 = vmatmul.mubr.bf16.gmra.mrb[0].mxu0 %v1441
        %v1642 = vpop.f32.mrb[0].mxu0
        %v1643 = vadd.f32 0.0, %v1642
        %v1644 = vpop.f32.mrb[0].mxu0
        %v1645 = vpop.f32.mrb[0].mxu0
        %v1646 = vadd.f32 0.0, %v1645
        %v1647 = vpop.f32.mrb[0].mxu0
        %1648 = vmatprep.mubr.bf16.mxu0 0
        %1649 = vmatmul.mubr.bf16.gmra.mrb[0].mxu0 %v1444
        %v1650 = vpop.f32.mrb[0].mxu0
        %v1651 = vadd.f32 0.0, %v1650
        %v1652 = vpop.f32.mrb[0].mxu0
        %v1653 = vpop.f32.mrb[0].mxu0
        %v1654 = vadd.f32 0.0, %v1653
        %v1655 = vpop.f32.mrb[0].mxu0
        %1656 = vmatprep.mubr.bf16.mxu0 0
        %1657 = vmatmul.mubr.bf16.gmra.mrb[0].mxu0 %v1563
        %v1658 = vpop.f32.mrb[0].mxu0
        %v1659 = vadd.f32 0.0, %v1658
        %v1660 = vpop.f32.mrb[0].mxu0
        %v1661 = vpop.f32.mrb[0].mxu0
        %v1662 = vadd.f32 0.0, %v1661
        %v1663 = vpop.f32.mrb[0].mxu0
        %1664 = vdwg.mxu0
        %v1665 = vadd.f32 %v1546, %v1603
        %v1666 = vadd.f32 %v1547, %v1606
        %v1667 = vadd.f32 %v1548, %v1611
        %v1668 = vadd.f32 %v1549, %v1614
        %v1669 = vadd.f32 %v1550, %v1619
        %v1670 = vadd.f32 %v1551, %v1622
        %v1671 = vadd.f32 %v1552, %v1627
        %v1672 = vadd.f32 %v1553, %v1630
        %v1673 = vadd.f32 %v1554, %v1635
        %v1674 = vadd.f32 %v1555, %v1638
        %v1675 = vadd.f32 %v1556, %v1643
        %v1676 = vadd.f32 %v1557, %v1646
        %v1677 = vadd.f32 %v1558, %v1651
        %v1678 = vadd.f32 %v1559, %v1654
        %v1679 = vadd.f32 %v1560, %v1659
        %v1680 = vadd.f32 %v1561, %v1662
        %v1682 = vsel %vm676, %v1421, 0
        %v1685 = vsel %vm701, %v665, 0
        %1687 = vmatprep.subr.bf16.mxu0 0
        %1688 = vmatpush1.bf16.msra.mxu0 %v1685
        %1689 = vmatprep.subr.bf16.mxu0 0
        %1690 = vmatpush1.bf16.msra.mxu0 0
        %1691 = vmatprep.subr.bf16.mxu0 0
        %1692 = vmatpush1.bf16.msra.mxu0 0
        %1693 = vmatprep.subr.bf16.mxu0 0
        %1694 = vmatpush1.bf16.msra.mxu0 0
        %1695 = vmatprep.subr.bf16.mxu0 0
        %1696 = vmatpush1.bf16.msra.mxu0 0
        %1697 = vmatprep.subr.bf16.mxu0 0
        %1698 = vmatpush1.bf16.msra.mxu0 0
        %1699 = vmatprep.subr.bf16.mxu0 0
        %1700 = vmatpush1.bf16.msra.mxu0 0
        %1701 = vmatprep.subr.bf16.mxu0 0
        %1702 = vmatpush1.bf16.msra.mxu0 0
        %1703 = vmatprep.subr.bf16.mxu0 0
        %1704 = vmatpush1.bf16.msra.mxu0 0
        %1705 = vmatprep.subr.bf16.mxu0 0
        %1706 = vmatpush1.bf16.msra.mxu0 0
        %1707 = vmatprep.subr.bf16.mxu0 0
        %1708 = vmatpush1.bf16.msra.mxu0 0
        %1709 = vmatprep.subr.bf16.mxu0 0
        %1710 = vmatpush1.bf16.msra.mxu0 0
        %1711 = vmatprep.subr.bf16.mxu0 0
        %1712 = vmatpush1.bf16.msra.mxu0 0
        %1713 = vmatprep.subr.bf16.mxu0 0
        %1714 = vmatpush1.bf16.msra.mxu0 0
        %1715 = vmatprep.subr.bf16.mxu0 0
        %1716 = vmatpush1.bf16.msra.mxu0 0
        %1717 = vmatprep.subr.bf16.mxu0 0
        %1718 = vmatpush1.bf16.msra.mxu0 0
        %1719 = vmatprep.mubr.bf16.mxu0 0
        %1720 = vmatmul.mubr.bf16.gmra.mrb[0].mxu0 %v1429
        %v1721 = vpop.f32.mrb[0].mxu0
        %v1722 = vadd.f32 0.0, %v1721
        %v1723 = vpop.f32.mrb[0].mxu0
        %v1724 = vpop.f32.mrb[0].mxu0
        %v1725 = vadd.f32 0.0, %v1724
        %v1726 = vpop.f32.mrb[0].mxu0
        %1727 = vmatprep.mubr.bf16.mxu0 0
        %1728 = vmatmul.mubr.bf16.gmra.mrb[0].mxu0 %v1432
        %v1729 = vpop.f32.mrb[0].mxu0
        %v1730 = vadd.f32 0.0, %v1729
        %v1731 = vpop.f32.mrb[0].mxu0
        %v1732 = vpop.f32.mrb[0].mxu0
        %v1733 = vadd.f32 0.0, %v1732
        %v1734 = vpop.f32.mrb[0].mxu0
        %1735 = vmatprep.mubr.bf16.mxu0 0
        %1736 = vmatmul.mubr.bf16.gmra.mrb[0].mxu0 %v1435
        %v1737 = vpop.f32.mrb[0].mxu0
        %v1738 = vadd.f32 0.0, %v1737
        %v1739 = vpop.f32.mrb[0].mxu0
        %v1740 = vpop.f32.mrb[0].mxu0
        %v1741 = vadd.f32 0.0, %v1740
        %v1742 = vpop.f32.mrb[0].mxu0
        %1743 = vmatprep.mubr.bf16.mxu0 0
        %1744 = vmatmul.mubr.bf16.gmra.mrb[0].mxu0 %v1438
        %v1745 = vpop.f32.mrb[0].mxu0
        %v1746 = vadd.f32 0.0, %v1745
        %v1747 = vpop.f32.mrb[0].mxu0
        %v1748 = vpop.f32.mrb[0].mxu0
        %v1749 = vadd.f32 0.0, %v1748
        %v1750 = vpop.f32.mrb[0].mxu0
        %1751 = vmatprep.mubr.bf16.mxu0 0
        %1752 = vmatmul.mubr.bf16.gmra.mrb[0].mxu0 %v1441
        %v1753 = vpop.f32.mrb[0].mxu0
        %v1754 = vadd.f32 0.0, %v1753
        %v1755 = vpop.f32.mrb[0].mxu0
        %v1756 = vpop.f32.mrb[0].mxu0
        %v1757 = vadd.f32 0.0, %v1756
        %v1758 = vpop.f32.mrb[0].mxu0
        %1759 = vmatprep.mubr.bf16.mxu0 0
        %1760 = vmatmul.mubr.bf16.gmra.mrb[0].mxu0 %v1444
        %v1761 = vpop.f32.mrb[0].mxu0
        %v1762 = vadd.f32 0.0, %v1761
        %v1763 = vpop.f32.mrb[0].mxu0
        %v1764 = vpop.f32.mrb[0].mxu0
        %v1765 = vadd.f32 0.0, %v1764
        %v1766 = vpop.f32.mrb[0].mxu0
        %1767 = vmatprep.mubr.bf16.mxu0 0
        %1768 = vmatmul.mubr.bf16.gmra.mrb[0].mxu0 %v1563
        %v1769 = vpop.f32.mrb[0].mxu0
        %v1770 = vadd.f32 0.0, %v1769
        %v1771 = vpop.f32.mrb[0].mxu0
        %v1772 = vpop.f32.mrb[0].mxu0
        %v1773 = vadd.f32 0.0, %v1772
        %v1774 = vpop.f32.mrb[0].mxu0
        %1775 = vmatprep.mubr.bf16.mxu0 0
        %1776 = vmatmul.mubr.bf16.gmra.mrb[0].mxu0 %v1682
        %v1777 = vpop.f32.mrb[0].mxu0
        %v1778 = vadd.f32 0.0, %v1777
        %v1779 = vpop.f32.mrb[0].mxu0
        %v1780 = vpop.f32.mrb[0].mxu0
        %v1781 = vadd.f32 0.0, %v1780
        %v1782 = vpop.f32.mrb[0].mxu0
        %1783 = vdwg.mxu0
        %v1784 = vadd.f32 %v1665, %v1722
        %v1785 = vadd.f32 %v1666, %v1725
        %v1786 = vadd.f32 %v1667, %v1730
        %v1787 = vadd.f32 %v1668, %v1733
        %v1788 = vadd.f32 %v1669, %v1738
        %v1789 = vadd.f32 %v1670, %v1741
        %v1790 = vadd.f32 %v1671, %v1746
        %v1791 = vadd.f32 %v1672, %v1749
        %v1792 = vadd.f32 %v1673, %v1754
        %v1793 = vadd.f32 %v1674, %v1757
        %v1794 = vadd.f32 %v1675, %v1762
        %v1795 = vadd.f32 %v1676, %v1765
        %v1796 = vadd.f32 %v1677, %v1770
        %v1797 = vadd.f32 %v1678, %v1773
        %v1798 = vadd.f32 %v1679, %v1778
        %v1799 = vadd.f32 %v1680, %v1781
        %1800 = vst [vmem:[%s361] sm:$0xff] %v1784
        %1801 = vst [vmem:[%s361 + $0x8] sm:$0xff] %v1785
        %1802 = vst [vmem:[%s361 + $0x10] sm:$0xff] %v1786
        %1803 = vst [vmem:[%s361 + $0x18] sm:$0xff] %v1787
        %1804 = vst [vmem:[%s361 + $0x20] sm:$0xff] %v1788
        %1805 = vst [vmem:[%s361 + $0x28] sm:$0xff] %v1789
        %1806 = vst [vmem:[%s361 + $0x30] sm:$0xff] %v1790
        %1807 = vst [vmem:[%s361 + $0x38] sm:$0xff] %v1791
        %1808 = vst [vmem:[%s361 + $0x40] sm:$0xff] %v1792
        %1809 = vst [vmem:[%s361 + $0x48] sm:$0xff] %v1793
        %1810 = vst [vmem:[%s361 + $0x50] sm:$0xff] %v1794
        %1811 = vst [vmem:[%s361 + $0x58] sm:$0xff] %v1795
        %1812 = vst [vmem:[%s361 + $0x60] sm:$0xff] %v1796
        %1813 = vst [vmem:[%s361 + $0x68] sm:$0xff] %v1797
        %1814 = vst [vmem:[%s361 + $0x70] sm:$0xff] %v1798
        %1815 = vst [vmem:[%s361 + $0x78] sm:$0xff] %v1799
        %s1816 = sand.u32 %s205, 1
        %s1817 = scalar_lea.sflag [#allocation3], %s1816
        %s1818 = sand.u32 %s205, 1
        %s1819 = smul.addr %s1818, 128
        %s1820 = scalar_lea.vmem [#allocation2], %s1819
        // Predicated region
        $region45: #{tpu_custom_call.1} parent=43 // pred_check
          %p1821 = pneg %p215
        $region46: #{tpu_custom_call.1} parent=43 // pred_check_branch
          %1823 = sbr.rel (%p1821) target = $region48
        $region47: #{tpu_custom_call.1} parent=43 // pred_region
          %s1824 = smul.u32 8, %s25
          %s1826 = ssub.s32 2048, 2048
          %1827 = vsyncadd %s1817, %s1826
          %s1828 = smul.addr %s1824, 2
          %s1829 = smul.addr %s24, 32
          %s1830 = sadd.s32 %s1828, %s1829
          %s1831 = smul.addr %s1830, 128
          %s1832 = scalar_lea.hbm %s6, %s1831
          %s1833 = sshll.u32 %s1820, 4
          %s1834 = int_to_ptr.vmem [resolvable:$true] %s1833
          %1839 = dma.vmem_to_hbm [thread:$0]  %s1834, 2048, %s1832, %s1817, 128, 128, 8
        $region48: #{tpu_custom_call.1} parent=43 // pred_fallthru
          _
      $region44: #{tpu_custom_call.1} parent=5 // pred_fallthru
        _
      %p1840 = scmp.le.s32.totalorder 2, %s15
      // Predicated region
      $region49: #{tpu_custom_call.1} parent=5 // pred_check
        %p1841 = pneg %p1840
      $region50: #{tpu_custom_call.1} parent=5 // pred_check_branch
        %1843 = sbr.rel (%p1841) target = $region52
      $region51: #{tpu_custom_call.1} parent=5 // pred_region
        %s1844 = ssub.s32 %s15, 2
        // Predicated region
        $region53: #{tpu_custom_call.1} parent=51 // pred_check
          %p1845 = pneg %p221
        $region54: #{tpu_custom_call.1} parent=51 // pred_check_branch
          %1847 = sbr.rel (%p1845) target = $region56
        $region55: #{tpu_custom_call.1} parent=51 // pred_region
          %s1848 = sand.u32 %s206, 1
          %s1849 = scalar_lea.sflag [#allocation3], %s1848
          %s1850 = sand.u32 %s206, 1
          %s1851 = smul.addr %s1850, 128
          %s1852 = scalar_lea.vmem [#allocation2], %s1851
          %1853 = dma.done %s1849, 2048
        $region56: #{tpu_custom_call.1} parent=51 // pred_fallthru
          _
      $region52: #{tpu_custom_call.1} parent=5 // pred_fallthru
        _
    $region6: #{tpu_custom_call.1} parent=1 // loop_footer
      %s19 = sadd.s32 1, %s15
    $region7: #{tpu_custom_call.1} parent=1 // loop_footer_branch
      %14 = sbr.rel target = $region3
    $region8: #{tpu_custom_call.1} parent=1 // loop_exit
      _
    %1854 = vsyncpa [#allocation3], 1
    %s1855 = scalar_lea.sflag [#allocation3], 1
    %1856 = vsyncpa %s1855, 1

</llo_original>
